<compile_context>
chip_gen: v7x
topology: tpu7x:2x2x1
jax: 0.10.0
libtpu: 0.0.40
codegen_flags: <defaults>
</compile_context>

<pallas_src>
import jax
import jax.numpy as jnp
from jax.experimental import pallas as pl
from jax.experimental.pallas import tpu as pltpu


def _round_up(x: int, m: int) -> int:
    return (x + m - 1) // m * m


def _make_rnn_kernel(seq_len, chunk_len, b_pad, unroll, needs_mask):
    def kernel(x_ref, wih_ref, whh_ref, b_ref, wout_ref, bout_ref, out_ref,
               h_scr, p_scr):
        """Per-chunk kernel body.

        x_ref   : (chunk_len*b_pad, E_pad) bf16  time-major embedded chunk
        wih_ref : (E_pad, H_pad)           bf16
        whh_ref : (H_pad, H_pad)           bf16
        b_ref   : (1, H_pad)               f32   (b_ih + b_hh)
        wout_ref: (H_pad, O_pad)           bf16
        bout_ref: (1, O_pad)               f32
        out_ref : (b_pad, O_pad)           f32   written only on the last chunk
        h_scr   : (b_pad, H_pad)           f32   persistent hidden state across chunks
        p_scr   : (chunk_len*b_pad, H_pad) f32   per-chunk hoisted input projection
        """
        c = pl.program_id(0)
        cdt = whh_ref.dtype  # bf16 MXU operand dtype

        # Hoisted per-chunk input projection: one lane-dense GEMM off the serial chain.
        p_scr[...] = (
            jnp.dot(x_ref[...], wih_ref[...], preferred_element_type=jnp.float32)
            + b_ref[...]
        )

        # Hoisted out of the time loop; the loop below is W_hh-only matmuls.
        whh = whh_ref[...]

        def step(t_local, h):
            row0 = pl.multiple_of(t_local * b_pad, b_pad)
            p_t = p_scr[pl.ds(row0, b_pad), :]
            h_new = jnp.tanh(
                p_t + jnp.dot(h.astype(cdt), whh, preferred_element_type=jnp.float32)
            )
            if needs_mask:  # only the last (ragged) chunk has padded timesteps
                t_global = c * chunk_len + t_local
                h_new = jnp.where(t_global < seq_len, h_new, h)
            return h_new

        @pl.when(c == 0)
        def _():
            # Peeled step 0: h_{-1} == 0, so h_0 = tanh(P[0]) -- no matmul needed.
            h1 = jnp.tanh(p_scr[pl.ds(0, b_pad), :])
            h_scr[...] = jax.lax.fori_loop(1, chunk_len, step, h1, unroll=unroll)

        @pl.when(c > 0)
        def _():
            h_scr[...] = jax.lax.fori_loop(0, chunk_len, step, h_scr[...],
                                           unroll=unroll)

        @pl.when(c == pl.num_programs(0) - 1)
        def _():
            # ReLU on the final hidden state + output Linear; lane-dense (b_pad, O_pad) store.
            relu_h = jnp.maximum(h_scr[...], 0.0)
            out_ref[...] = (
                jnp.dot(relu_h.astype(cdt), wout_ref[...],
                        preferred_element_type=jnp.float32)
                + bout_ref[...]
            ).astype(out_ref.dtype)

    return kernel


def simple_rnn_forward(text, params, compute_dtype=jnp.bfloat16, max_chunk_len=64):
    """text: (seq_len, batch) int32. Returns (batch, output_dim) float32."""
    emb_table = params["embedding"]          # (V, E) f32 (padding_idx row is zero)
    w_ih = params["w_ih"]                    # (E, H)
    w_hh = params["w_hh"]                    # (H, H)
    b = params["b"]                          # (1, H)  == b_ih + b_hh
    w_out = params["w_out"]                  # (H, O)
    b_out = params["b_out"]                  # (1, O)
    pad_idx = int(params["pad_idx"])

    seq_len, batch = text.shape
    e_dim, h_dim = w_ih.shape
    o_dim = w_out.shape[1]

    # Padding: batch -> multiple of 16 (full bf16 (16,128) MXU LHS tiles); emb/hidden/output
    # dims -> multiples of 128 lanes. Padded weight rows/cols and bias lanes are zero.
    b_pad = _round_up(batch, 16)
    e_pad = _round_up(e_dim, 128)
    h_pad = _round_up(h_dim, 128)
    o_pad = _round_up(o_dim, 128)

    # Sequence chunking: per-chunk x slab + P scratch stay O(chunk); hidden state carried
    # in VMEM scratch across grid steps.
    chunk_len = min(seq_len, max_chunk_len)
    num_chunks = pl.cdiv(seq_len, chunk_len)
    seq_pad = num_chunks * chunk_len
    needs_mask = seq_pad != seq_len
    unroll = True if chunk_len <= 8 else 8

    # Embedding lookup (plain-JAX glue): pad the token matrix first (pad_idx row of the
    # table is zero), gather from a bf16 copy of the table -- no (S,B,E) f32 copy.
    # TODO(synk): at large vocab/seq, fuse this gather into the kernel via
    # PrefetchScalarGridSpec + pl.Element row-gather index_maps.
    text_p = jnp.pad(text, ((0, seq_pad - seq_len), (0, b_pad - batch)),
                     constant_values=pad_idx)
    emb = jnp.take(emb_table.astype(compute_dtype), text_p, axis=0)  # (S_pad, B_pad, E)
    emb = jnp.pad(emb, ((0, 0), (0, 0), (0, e_pad - e_dim)))
    x2d = emb.reshape(seq_pad * b_pad, e_pad)

    w_ih_p = jnp.pad(w_ih, ((0, e_pad - e_dim), (0, h_pad - h_dim))).astype(compute_dtype)
    w_hh_p = jnp.pad(w_hh, ((0, h_pad - h_dim), (0, h_pad - h_dim))).astype(compute_dtype)
    b_p = jnp.pad(b, ((0, 0), (0, h_pad - h_dim))).astype(jnp.float32)
    w_out_p = jnp.pad(w_out, ((0, h_pad - h_dim), (0, o_pad - o_dim))).astype(compute_dtype)
    b_out_p = jnp.pad(b_out, ((0, 0), (0, o_pad - o_dim))).astype(jnp.float32)

    kernel = _make_rnn_kernel(seq_len, chunk_len, b_pad, unroll, needs_mask)

    out_pad = pl.pallas_call(
        kernel,
        out_shape=jax.ShapeDtypeStruct((b_pad, o_pad), jnp.float32),
        grid_spec=pltpu.PrefetchScalarGridSpec(
            num_scalar_prefetch=0,
            grid=(num_chunks,),
            in_specs=[
                # Per-chunk x slab: pipelined across chunks (next chunk's DMA overlaps
                # this chunk's serial recurrence).
                pl.BlockSpec((chunk_len * b_pad, e_pad), lambda c: (c, 0)),
                # Weights/biases: constant block index -> DMA'd once, not re-fetched.
                pl.BlockSpec((e_pad, h_pad), lambda c: (0, 0)),
                pl.BlockSpec((h_pad, h_pad), lambda c: (0, 0)),
                pl.BlockSpec((1, h_pad), lambda c: (0, 0)),
                pl.BlockSpec((h_pad, o_pad), lambda c: (0, 0)),
                pl.BlockSpec((1, o_pad), lambda c: (0, 0)),
            ],
            out_specs=pl.BlockSpec((b_pad, o_pad), lambda c: (0, 0)),
            scratch_shapes=[
                pltpu.VMEM((b_pad, h_pad), jnp.float32),              # persistent h
                pltpu.VMEM((chunk_len * b_pad, h_pad), jnp.float32),  # per-chunk P
            ],
        ),
        compiler_params=pltpu.CompilerParams(
            # The chunk axis carries the hidden state -> serial ("arbitrary").
            # TODO(synk): on v7x with large batch, add a leading batch-tile axis marked
            # "parallel" so both TensorCores run independent batch slices.
            dimension_semantics=("arbitrary",),
        ),
    )(x2d, w_ih_p, w_hh_p, b_p, w_out_p, b_out_p)

    return out_pad[:batch, :o_dim]


def init_params(key, vocab, emb_dim, hidden_dim, output_dim, pad_idx):
    ks = jax.random.split(key, 6)
    scale = 0.1
    embedding = scale * jax.random.normal(ks[0], (vocab, emb_dim), jnp.float32)
    embedding = embedding.at[pad_idx].set(0.0)  # padding_idx row is zero
    w_ih = scale * jax.random.normal(ks[1], (emb_dim, hidden_dim), jnp.float32)
    w_hh = scale * jax.random.normal(ks[2], (hidden_dim, hidden_dim), jnp.float32)
    b_ih = scale * jax.random.normal(ks[3], (hidden_dim,), jnp.float32)
    b_hh = scale * jax.random.normal(ks[4], (hidden_dim,), jnp.float32)
    w_out = scale * jax.random.normal(ks[5], (hidden_dim, output_dim), jnp.float32)
    b_out = jnp.zeros((output_dim,), jnp.float32)
    return {
        "embedding": embedding,
        "w_ih": w_ih,
        "w_hh": w_hh,
        "b": (b_ih + b_hh).reshape(1, hidden_dim),
        "w_out": w_out,
        "b_out": b_out.reshape(1, output_dim),
        "pad_idx": pad_idx,
    }


def reference_forward(text, params, compute_dtype=jnp.bfloat16):
    """Pure-JAX reference mirroring SimpleRNN.forward with the same mixed precision
    as the kernel (bf16 matmul operands, f32 accumulation & hidden state)."""
    emb = jnp.take(params["embedding"], text, axis=0)  # (S, B, E)
    batch = text.shape[1]
    hidden = params["w_ih"].shape[1]

    x = emb.astype(compute_dtype)
    w_ih = params["w_ih"].astype(compute_dtype)
    w_hh = params["w_hh"].astype(compute_dtype)
    w_out = params["w_out"].astype(compute_dtype)

    p = (
        jnp.einsum("sbe,eh->sbh", x, w_ih, preferred_element_type=jnp.float32)
        + params["b"]
    )

    def step(h, p_t):
        h_new = jnp.tanh(
            p_t
            + jnp.dot(h.astype(compute_dtype), w_hh,
                      preferred_element_type=jnp.float32)
        )
        return h_new, None

    h0 = jnp.zeros((batch, hidden), jnp.float32)
    h_final, _ = jax.lax.scan(step, h0, p)
    relu_h = jnp.maximum(h_final, 0.0)
    return (
        jnp.dot(relu_h.astype(compute_dtype), w_out,
                preferred_element_type=jnp.float32)
        + params["b_out"]
    )


if __name__ == "__main__":
    key = jax.random.PRNGKey(0)
    k_param, k_text = jax.random.split(key)

    vocab = 20
    emb_dim = 16
    hidden_dim = 32
    output_dim = 4
    pad_idx = 0
    seq_len = 8
    batch = 2

    params = init_params(k_param, vocab, emb_dim, hidden_dim, output_dim, pad_idx)
    text = jax.random.randint(k_text, (seq_len, batch), 0, vocab, dtype=jnp.int32)

    out = simple_rnn_forward(text, params)
    out = jax.block_until_ready(out)

    ref = reference_forward(text, params)
    assert out.shape == (batch, output_dim)
    assert jnp.allclose(out, ref, atol=1e-4, rtol=1e-4), (out, ref)

    print("KERNEL_OK")
</pallas_src>

<mosaic_0001>
module attributes {stable_mosaic.version = 11 : i64} {
  func.func @kernel(%arg0: i32, %arg1: memref<128x128xbf16, #tpu.memory_space<vmem>>, %arg2: memref<128x128xbf16, #tpu.memory_space<vmem>>, %arg3: memref<128x128xbf16, #tpu.memory_space<vmem>>, %arg4: memref<1x128xf32, #tpu.memory_space<vmem>>, %arg5: memref<128x128xbf16, #tpu.memory_space<vmem>>, %arg6: memref<1x128xf32, #tpu.memory_space<vmem>>, %arg7: memref<16x128xf32, #tpu.memory_space<vmem>>, %arg8: memref<16x128xf32, #tpu.memory_space<vmem>>, %arg9: memref<128x128xf32, #tpu.memory_space<vmem>>) attributes {dimension_semantics = [#tpu.dimension_semantics<arbitrary>], iteration_bounds = array<i64: 1>, scalar_prefetch = 0 : i64, scratch_operands = 2 : i64, tpu.core_type = #tpu.core_type<tc>, window_params = [{transform_indices = @transform_0, window_bounds = array<i64: 128, 128>}, {pipeline_mode = #tpu.pipeline_mode<synchronous>, transform_indices = @transform_1, window_bounds = array<i64: 128, 128>}, {pipeline_mode = #tpu.pipeline_mode<synchronous>, transform_indices = @transform_2, window_bounds = array<i64: 128, 128>}, {pipeline_mode = #tpu.pipeline_mode<synchronous>, transform_indices = @transform_3, window_bounds = array<i64: 1, 128>}, {pipeline_mode = #tpu.pipeline_mode<synchronous>, transform_indices = @transform_4, window_bounds = array<i64: 128, 128>}, {pipeline_mode = #tpu.pipeline_mode<synchronous>, transform_indices = @transform_5, window_bounds = array<i64: 1, 128>}, {pipeline_mode = #tpu.pipeline_mode<synchronous>, transform_indices = @transform_6, window_bounds = array<i64: 16, 128>}]} {
    %c0 = arith.constant 0 : index
    %c0_0 = arith.constant 0 : index
    %0 = vector.load %arg1[%c0, %c0_0] : memref<128x128xbf16, #tpu.memory_space<vmem>>, vector<128x128xbf16>
    %c0_1 = arith.constant 0 : index
    %c0_2 = arith.constant 0 : index
    %1 = vector.load %arg2[%c0_1, %c0_2] : memref<128x128xbf16, #tpu.memory_space<vmem>>, vector<128x128xbf16>
    %cst = arith.constant dense<0.000000e+00> : vector<128x128xf32>
    %2 = tpu.matmul %0, %1, %cst {dimension_numbers = #tpu.dot_dimension_numbers<[1], [0], [0], [1], [0, 0, 1, 1], [], []>} : vector<128x128xbf16>, vector<128x128xbf16>, vector<128x128xf32> -> vector<128x128xf32>
    %c0_3 = arith.constant 0 : index
    %c0_4 = arith.constant 0 : index
    %3 = vector.load %arg4[%c0_3, %c0_4] : memref<1x128xf32, #tpu.memory_space<vmem>>, vector<1x128xf32>
    %4 = vector.broadcast %3 : vector<1x128xf32> to vector<128x128xf32>
    %5 = arith.addf %2, %4 : vector<128x128xf32>
    %c0_5 = arith.constant 0 : index
    %c0_6 = arith.constant 0 : index
    %6 = vector.load %arg9[%c0_5, %c0_6] : memref<128x128xf32, #tpu.memory_space<vmem>>, vector<128x128xf32>
    tpu.vector_store %arg9[%c0_5, %c0_6], %5 {strides = array<i32>} : memref<128x128xf32, #tpu.memory_space<vmem>>, vector<128x128xf32>,
    %c0_7 = arith.constant 0 : index
    %c0_8 = arith.constant 0 : index
    %7 = vector.load %arg3[%c0_7, %c0_8] : memref<128x128xbf16, #tpu.memory_space<vmem>>, vector<128x128xbf16>
    %c0_i32 = arith.constant 0 : i32
    %8 = arith.cmpi eq, %arg0, %c0_i32 : i32
    %9 = arith.extui %8 : i1 to i32
    %c0_i32_9 = arith.constant 0 : i32
    %10 = arith.cmpi ne, %9, %c0_i32_9 : i32
    scf.if %10 {
      %c0_14 = arith.constant 0 : index
      %c0_15 = arith.constant 0 : index
      %17 = vector.load %arg9[%c0_14, %c0_15] : memref<128x128xf32, #tpu.memory_space<vmem>>, vector<16x128xf32>
      %18 = math.tanh %17 : vector<16x128xf32>
      %c1_i32 = arith.constant 1 : i32
      %c16_i32 = arith.constant 16 : i32
      %19 = arith.muli %c1_i32, %c16_i32 : i32
      %20 = tpu.assume_multiple %19, 16 : i32
      %21 = arith.index_cast %20 : i32 to index
      %c0_16 = arith.constant 0 : index
      %22 = vector.load %arg9[%21, %c0_16] : memref<128x128xf32, #tpu.memory_space<vmem>>, vector<16x128xf32>
      %23 = arith.truncf %18 : vector<16x128xf32> to vector<16x128xbf16>
      %cst_17 = arith.constant dense<0.000000e+00> : vector<16x128xf32>
      %24 = tpu.matmul %23, %7, %cst_17 {dimension_numbers = #tpu.dot_dimension_numbers<[1], [0], [0], [1], [0, 0, 1, 1], [], []>} : vector<16x128xbf16>, vector<128x128xbf16>, vector<16x128xf32> -> vector<16x128xf32>
      %25 = arith.addf %22, %24 : vector<16x128xf32>
      %26 = math.tanh %25 : vector<16x128xf32>
      %c2_i32 = arith.constant 2 : i32
      %c16_i32_18 = arith.constant 16 : i32
      %27 = arith.muli %c2_i32, %c16_i32_18 : i32
      %28 = tpu.assume_multiple %27, 16 : i32
      %29 = arith.index_cast %28 : i32 to index
      %c0_19 = arith.constant 0 : index
      %30 = vector.load %arg9[%29, %c0_19] : memref<128x128xf32, #tpu.memory_space<vmem>>, vector<16x128xf32>
      %31 = arith.truncf %26 : vector<16x128xf32> to vector<16x128xbf16>
      %cst_20 = arith.constant dense<0.000000e+00> : vector<16x128xf32>
      %32 = tpu.matmul %31, %7, %cst_20 {dimension_numbers = #tpu.dot_dimension_numbers<[1], [0], [0], [1], [0, 0, 1, 1], [], []>} : vector<16x128xbf16>, vector<128x128xbf16>, vector<16x128xf32> -> vector<16x128xf32>
      %33 = arith.addf %30, %32 : vector<16x128xf32>
      %34 = math.tanh %33 : vector<16x128xf32>
      %c3_i32 = arith.constant 3 : i32
      %c16_i32_21 = arith.constant 16 : i32
      %35 = arith.muli %c3_i32, %c16_i32_21 : i32
      %36 = tpu.assume_multiple %35, 16 : i32
      %37 = arith.index_cast %36 : i32 to index
      %c0_22 = arith.constant 0 : index
      %38 = vector.load %arg9[%37, %c0_22] : memref<128x128xf32, #tpu.memory_space<vmem>>, vector<16x128xf32>
      %39 = arith.truncf %34 : vector<16x128xf32> to vector<16x128xbf16>
      %cst_23 = arith.constant dense<0.000000e+00> : vector<16x128xf32>
      %40 = tpu.matmul %39, %7, %cst_23 {dimension_numbers = #tpu.dot_dimension_numbers<[1], [0], [0], [1], [0, 0, 1, 1], [], []>} : vector<16x128xbf16>, vector<128x128xbf16>, vector<16x128xf32> -> vector<16x128xf32>
      %41 = arith.addf %38, %40 : vector<16x128xf32>
      %42 = math.tanh %41 : vector<16x128xf32>
      %c4_i32 = arith.constant 4 : i32
      %c16_i32_24 = arith.constant 16 : i32
      %43 = arith.muli %c4_i32, %c16_i32_24 : i32
      %44 = tpu.assume_multiple %43, 16 : i32
      %45 = arith.index_cast %44 : i32 to index
      %c0_25 = arith.constant 0 : index
      %46 = vector.load %arg9[%45, %c0_25] : memref<128x128xf32, #tpu.memory_space<vmem>>, vector<16x128xf32>
      %47 = arith.truncf %42 : vector<16x128xf32> to vector<16x128xbf16>
      %cst_26 = arith.constant dense<0.000000e+00> : vector<16x128xf32>
      %48 = tpu.matmul %47, %7, %cst_26 {dimension_numbers = #tpu.dot_dimension_numbers<[1], [0], [0], [1], [0, 0, 1, 1], [], []>} : vector<16x128xbf16>, vector<128x128xbf16>, vector<16x128xf32> -> vector<16x128xf32>
      %49 = arith.addf %46, %48 : vector<16x128xf32>
      %50 = math.tanh %49 : vector<16x128xf32>
      %c5_i32 = arith.constant 5 : i32
      %c16_i32_27 = arith.constant 16 : i32
      %51 = arith.muli %c5_i32, %c16_i32_27 : i32
      %52 = tpu.assume_multiple %51, 16 : i32
      %53 = arith.index_cast %52 : i32 to index
      %c0_28 = arith.constant 0 : index
      %54 = vector.load %arg9[%53, %c0_28] : memref<128x128xf32, #tpu.memory_space<vmem>>, vector<16x128xf32>
      %55 = arith.truncf %50 : vector<16x128xf32> to vector<16x128xbf16>
      %cst_29 = arith.constant dense<0.000000e+00> : vector<16x128xf32>
      %56 = tpu.matmul %55, %7, %cst_29 {dimension_numbers = #tpu.dot_dimension_numbers<[1], [0], [0], [1], [0, 0, 1, 1], [], []>} : vector<16x128xbf16>, vector<128x128xbf16>, vector<16x128xf32> -> vector<16x128xf32>
      %57 = arith.addf %54, %56 : vector<16x128xf32>
      %58 = math.tanh %57 : vector<16x128xf32>
      %c6_i32 = arith.constant 6 : i32
      %c16_i32_30 = arith.constant 16 : i32
      %59 = arith.muli %c6_i32, %c16_i32_30 : i32
      %60 = tpu.assume_multiple %59, 16 : i32
      %61 = arith.index_cast %60 : i32 to index
      %c0_31 = arith.constant 0 : index
      %62 = vector.load %arg9[%61, %c0_31] : memref<128x128xf32, #tpu.memory_space<vmem>>, vector<16x128xf32>
      %63 = arith.truncf %58 : vector<16x128xf32> to vector<16x128xbf16>
      %cst_32 = arith.constant dense<0.000000e+00> : vector<16x128xf32>
      %64 = tpu.matmul %63, %7, %cst_32 {dimension_numbers = #tpu.dot_dimension_numbers<[1], [0], [0], [1], [0, 0, 1, 1], [], []>} : vector<16x128xbf16>, vector<128x128xbf16>, vector<16x128xf32> -> vector<16x128xf32>
      %65 = arith.addf %62, %64 : vector<16x128xf32>
      %66 = math.tanh %65 : vector<16x128xf32>
      %c7_i32 = arith.constant 7 : i32
      %c16_i32_33 = arith.constant 16 : i32
      %67 = arith.muli %c7_i32, %c16_i32_33 : i32
      %68 = tpu.assume_multiple %67, 16 : i32
      %69 = arith.index_cast %68 : i32 to index
      %c0_34 = arith.constant 0 : index
      %70 = vector.load %arg9[%69, %c0_34] : memref<128x128xf32, #tpu.memory_space<vmem>>, vector<16x128xf32>
      %71 = arith.truncf %66 : vector<16x128xf32> to vector<16x128xbf16>
      %cst_35 = arith.constant dense<0.000000e+00> : vector<16x128xf32>
      %72 = tpu.matmul %71, %7, %cst_35 {dimension_numbers = #tpu.dot_dimension_numbers<[1], [0], [0], [1], [0, 0, 1, 1], [], []>} : vector<16x128xbf16>, vector<128x128xbf16>, vector<16x128xf32> -> vector<16x128xf32>
      %73 = arith.addf %70, %72 : vector<16x128xf32>
      %74 = math.tanh %73 : vector<16x128xf32>
      %c7_i32_36 = arith.constant 7 : i32
      %c0_37 = arith.constant 0 : index
      %c0_38 = arith.constant 0 : index
      %75 = vector.load %arg8[%c0_37, %c0_38] : memref<16x128xf32, #tpu.memory_space<vmem>>, vector<16x128xf32>
      tpu.vector_store %arg8[%c0_37, %c0_38], %74 {strides = array<i32>} : memref<16x128xf32, #tpu.memory_space<vmem>>, vector<16x128xf32>,
    } else {
    }
    %c0_i32_10 = arith.constant 0 : i32
    %11 = arith.cmpi sgt, %arg0, %c0_i32_10 : i32
    %12 = arith.extui %11 : i1 to i32
    %c0_i32_11 = arith.constant 0 : i32
    %13 = arith.cmpi ne, %12, %c0_i32_11 : i32
    scf.if %13 {
      %c0_14 = arith.constant 0 : index
      %c0_15 = arith.constant 0 : index
      %17 = vector.load %arg8[%c0_14, %c0_15] : memref<16x128xf32, #tpu.memory_space<vmem>>, vector<16x128xf32>
      %c0_i32_16 = arith.constant 0 : i32
      %c16_i32 = arith.constant 16 : i32
      %18 = arith.muli %c0_i32_16, %c16_i32 : i32
      %19 = tpu.assume_multiple %18, 16 : i32
      %20 = arith.index_cast %19 : i32 to index
      %c0_17 = arith.constant 0 : index
      %21 = vector.load %arg9[%20, %c0_17] : memref<128x128xf32, #tpu.memory_space<vmem>>, vector<16x128xf32>
      %22 = arith.truncf %17 : vector<16x128xf32> to vector<16x128xbf16>
      %cst_18 = arith.constant dense<0.000000e+00> : vector<16x128xf32>
      %23 = tpu.matmul %22, %7, %cst_18 {dimension_numbers = #tpu.dot_dimension_numbers<[1], [0], [0], [1], [0, 0, 1, 1], [], []>} : vector<16x128xbf16>, vector<128x128xbf16>, vector<16x128xf32> -> vector<16x128xf32>
      %24 = arith.addf %21, %23 : vector<16x128xf32>
      %25 = math.tanh %24 : vector<16x128xf32>
      %c1_i32 = arith.constant 1 : i32
      %c16_i32_19 = arith.constant 16 : i32
      %26 = arith.muli %c1_i32, %c16_i32_19 : i32
      %27 = tpu.assume_multiple %26, 16 : i32
      %28 = arith.index_cast %27 : i32 to index
      %c0_20 = arith.constant 0 : index
      %29 = vector.load %arg9[%28, %c0_20] : memref<128x128xf32, #tpu.memory_space<vmem>>, vector<16x128xf32>
      %30 = arith.truncf %25 : vector<16x128xf32> to vector<16x128xbf16>
      %cst_21 = arith.constant dense<0.000000e+00> : vector<16x128xf32>
      %31 = tpu.matmul %30, %7, %cst_21 {dimension_numbers = #tpu.dot_dimension_numbers<[1], [0], [0], [1], [0, 0, 1, 1], [], []>} : vector<16x128xbf16>, vector<128x128xbf16>, vector<16x128xf32> -> vector<16x128xf32>
      %32 = arith.addf %29, %31 : vector<16x128xf32>
      %33 = math.tanh %32 : vector<16x128xf32>
      %c2_i32 = arith.constant 2 : i32
      %c16_i32_22 = arith.constant 16 : i32
      %34 = arith.muli %c2_i32, %c16_i32_22 : i32
      %35 = tpu.assume_multiple %34, 16 : i32
      %36 = arith.index_cast %35 : i32 to index
      %c0_23 = arith.constant 0 : index
      %37 = vector.load %arg9[%36, %c0_23] : memref<128x128xf32, #tpu.memory_space<vmem>>, vector<16x128xf32>
      %38 = arith.truncf %33 : vector<16x128xf32> to vector<16x128xbf16>
      %cst_24 = arith.constant dense<0.000000e+00> : vector<16x128xf32>
      %39 = tpu.matmul %38, %7, %cst_24 {dimension_numbers = #tpu.dot_dimension_numbers<[1], [0], [0], [1], [0, 0, 1, 1], [], []>} : vector<16x128xbf16>, vector<128x128xbf16>, vector<16x128xf32> -> vector<16x128xf32>
      %40 = arith.addf %37, %39 : vector<16x128xf32>
      %41 = math.tanh %40 : vector<16x128xf32>
      %c3_i32 = arith.constant 3 : i32
      %c16_i32_25 = arith.constant 16 : i32
      %42 = arith.muli %c3_i32, %c16_i32_25 : i32
      %43 = tpu.assume_multiple %42, 16 : i32
      %44 = arith.index_cast %43 : i32 to index
      %c0_26 = arith.constant 0 : index
      %45 = vector.load %arg9[%44, %c0_26] : memref<128x128xf32, #tpu.memory_space<vmem>>, vector<16x128xf32>
      %46 = arith.truncf %41 : vector<16x128xf32> to vector<16x128xbf16>
      %cst_27 = arith.constant dense<0.000000e+00> : vector<16x128xf32>
      %47 = tpu.matmul %46, %7, %cst_27 {dimension_numbers = #tpu.dot_dimension_numbers<[1], [0], [0], [1], [0, 0, 1, 1], [], []>} : vector<16x128xbf16>, vector<128x128xbf16>, vector<16x128xf32> -> vector<16x128xf32>
      %48 = arith.addf %45, %47 : vector<16x128xf32>
      %49 = math.tanh %48 : vector<16x128xf32>
      %c4_i32 = arith.constant 4 : i32
      %c16_i32_28 = arith.constant 16 : i32
      %50 = arith.muli %c4_i32, %c16_i32_28 : i32
      %51 = tpu.assume_multiple %50, 16 : i32
      %52 = arith.index_cast %51 : i32 to index
      %c0_29 = arith.constant 0 : index
      %53 = vector.load %arg9[%52, %c0_29] : memref<128x128xf32, #tpu.memory_space<vmem>>, vector<16x128xf32>
      %54 = arith.truncf %49 : vector<16x128xf32> to vector<16x128xbf16>
      %cst_30 = arith.constant dense<0.000000e+00> : vector<16x128xf32>
      %55 = tpu.matmul %54, %7, %cst_30 {dimension_numbers = #tpu.dot_dimension_numbers<[1], [0], [0], [1], [0, 0, 1, 1], [], []>} : vector<16x128xbf16>, vector<128x128xbf16>, vector<16x128xf32> -> vector<16x128xf32>
      %56 = arith.addf %53, %55 : vector<16x128xf32>
      %57 = math.tanh %56 : vector<16x128xf32>
      %c5_i32 = arith.constant 5 : i32
      %c16_i32_31 = arith.constant 16 : i32
      %58 = arith.muli %c5_i32, %c16_i32_31 : i32
      %59 = tpu.assume_multiple %58, 16 : i32
      %60 = arith.index_cast %59 : i32 to index
      %c0_32 = arith.constant 0 : index
      %61 = vector.load %arg9[%60, %c0_32] : memref<128x128xf32, #tpu.memory_space<vmem>>, vector<16x128xf32>
      %62 = arith.truncf %57 : vector<16x128xf32> to vector<16x128xbf16>
      %cst_33 = arith.constant dense<0.000000e+00> : vector<16x128xf32>
      %63 = tpu.matmul %62, %7, %cst_33 {dimension_numbers = #tpu.dot_dimension_numbers<[1], [0], [0], [1], [0, 0, 1, 1], [], []>} : vector<16x128xbf16>, vector<128x128xbf16>, vector<16x128xf32> -> vector<16x128xf32>
      %64 = arith.addf %61, %63 : vector<16x128xf32>
      %65 = math.tanh %64 : vector<16x128xf32>
      %c6_i32 = arith.constant 6 : i32
      %c16_i32_34 = arith.constant 16 : i32
      %66 = arith.muli %c6_i32, %c16_i32_34 : i32
      %67 = tpu.assume_multiple %66, 16 : i32
      %68 = arith.index_cast %67 : i32 to index
      %c0_35 = arith.constant 0 : index
      %69 = vector.load %arg9[%68, %c0_35] : memref<128x128xf32, #tpu.memory_space<vmem>>, vector<16x128xf32>
      %70 = arith.truncf %65 : vector<16x128xf32> to vector<16x128xbf16>
      %cst_36 = arith.constant dense<0.000000e+00> : vector<16x128xf32>
      %71 = tpu.matmul %70, %7, %cst_36 {dimension_numbers = #tpu.dot_dimension_numbers<[1], [0], [0], [1], [0, 0, 1, 1], [], []>} : vector<16x128xbf16>, vector<128x128xbf16>, vector<16x128xf32> -> vector<16x128xf32>
      %72 = arith.addf %69, %71 : vector<16x128xf32>
      %73 = math.tanh %72 : vector<16x128xf32>
      %c7_i32 = arith.constant 7 : i32
      %c16_i32_37 = arith.constant 16 : i32
      %74 = arith.muli %c7_i32, %c16_i32_37 : i32
      %75 = tpu.assume_multiple %74, 16 : i32
      %76 = arith.index_cast %75 : i32 to index
      %c0_38 = arith.constant 0 : index
      %77 = vector.load %arg9[%76, %c0_38] : memref<128x128xf32, #tpu.memory_space<vmem>>, vector<16x128xf32>
      %78 = arith.truncf %73 : vector<16x128xf32> to vector<16x128xbf16>
      %cst_39 = arith.constant dense<0.000000e+00> : vector<16x128xf32>
      %79 = tpu.matmul %78, %7, %cst_39 {dimension_numbers = #tpu.dot_dimension_numbers<[1], [0], [0], [1], [0, 0, 1, 1], [], []>} : vector<16x128xbf16>, vector<128x128xbf16>, vector<16x128xf32> -> vector<16x128xf32>
      %80 = arith.addf %77, %79 : vector<16x128xf32>
      %81 = math.tanh %80 : vector<16x128xf32>
      %c8_i32 = arith.constant 8 : i32
      %c0_40 = arith.constant 0 : index
      %c0_41 = arith.constant 0 : index
      %82 = vector.load %arg8[%c0_40, %c0_41] : memref<16x128xf32, #tpu.memory_space<vmem>>, vector<16x128xf32>
      tpu.vector_store %arg8[%c0_40, %c0_41], %81 {strides = array<i32>} : memref<16x128xf32, #tpu.memory_space<vmem>>, vector<16x128xf32>,
    } else {
    }
    %c0_i32_12 = arith.constant 0 : i32
    %14 = arith.cmpi eq, %arg0, %c0_i32_12 : i32
    %15 = arith.extui %14 : i1 to i32
    %c0_i32_13 = arith.constant 0 : i32
    %16 = arith.cmpi ne, %15, %c0_i32_13 : i32
    scf.if %16 {
      %c0_14 = arith.constant 0 : index
      %c0_15 = arith.constant 0 : index
      %17 = vector.load %arg8[%c0_14, %c0_15] : memref<16x128xf32, #tpu.memory_space<vmem>>, vector<16x128xf32>
      %cst_16 = arith.constant 0.000000e+00 : f32
      %18 = vector.broadcast %cst_16 : f32 to vector<16x128xf32>
      %19 = arith.maximumf %17, %18 : vector<16x128xf32>
      %20 = arith.truncf %19 : vector<16x128xf32> to vector<16x128xbf16>
      %c0_17 = arith.constant 0 : index
      %c0_18 = arith.constant 0 : index
      %21 = vector.load %arg5[%c0_17, %c0_18] : memref<128x128xbf16, #tpu.memory_space<vmem>>, vector<128x128xbf16>
      %cst_19 = arith.constant dense<0.000000e+00> : vector<16x128xf32>
      %22 = tpu.matmul %20, %21, %cst_19 {dimension_numbers = #tpu.dot_dimension_numbers<[1], [0], [0], [1], [0, 0, 1, 1], [], []>} : vector<16x128xbf16>, vector<128x128xbf16>, vector<16x128xf32> -> vector<16x128xf32>
      %c0_20 = arith.constant 0 : index
      %c0_21 = arith.constant 0 : index
      %23 = vector.load %arg6[%c0_20, %c0_21] : memref<1x128xf32, #tpu.memory_space<vmem>>, vector<1x128xf32>
      %24 = vector.broadcast %23 : vector<1x128xf32> to vector<16x128xf32>
      %25 = arith.addf %22, %24 : vector<16x128xf32>
      %c0_22 = arith.constant 0 : index
      %c0_23 = arith.constant 0 : index
      %26 = vector.load %arg7[%c0_22, %c0_23] : memref<16x128xf32, #tpu.memory_space<vmem>>, vector<16x128xf32>
      tpu.vector_store %arg7[%c0_22, %c0_23], %25 {strides = array<i32>} : memref<16x128xf32, #tpu.memory_space<vmem>>, vector<16x128xf32>,
    } else {
    }
    return
  }
  func.func @transform_0(%arg0: i32) -> (i32, i32) {
    %c0_i32 = arith.constant 0 : i32
    %c0_i32_0 = arith.constant 0 : i32
    return %arg0, %c0_i32 : i32, i32
  }
  func.func @transform_1(%arg0: i32) -> (i32, i32) {
    %c0_i32 = arith.constant 0 : i32
    %c0_i32_0 = arith.constant 0 : i32
    %c0_i32_1 = arith.constant 0 : i32
    return %c0_i32, %c0_i32_0 : i32, i32
  }
  func.func @transform_2(%arg0: i32) -> (i32, i32) {
    %c0_i32 = arith.constant 0 : i32
    %c0_i32_0 = arith.constant 0 : i32
    %c0_i32_1 = arith.constant 0 : i32
    return %c0_i32, %c0_i32_0 : i32, i32
  }
  func.func @transform_3(%arg0: i32) -> (i32, i32) {
    %c0_i32 = arith.constant 0 : i32
    %c0_i32_0 = arith.constant 0 : i32
    %c0_i32_1 = arith.constant 0 : i32
    return %c0_i32, %c0_i32_0 : i32, i32
  }
  func.func @transform_4(%arg0: i32) -> (i32, i32) {
    %c0_i32 = arith.constant 0 : i32
    %c0_i32_0 = arith.constant 0 : i32
    %c0_i32_1 = arith.constant 0 : i32
    return %c0_i32, %c0_i32_0 : i32, i32
  }
  func.func @transform_5(%arg0: i32) -> (i32, i32) {
    %c0_i32 = arith.constant 0 : i32
    %c0_i32_0 = arith.constant 0 : i32
    %c0_i32_1 = arith.constant 0 : i32
    return %c0_i32, %c0_i32_0 : i32, i32
  }
  func.func @transform_6(%arg0: i32) -> (i32, i32) {
    %c0_i32 = arith.constant 0 : i32
    %c0_i32_0 = arith.constant 0 : i32
    %c0_i32_1 = arith.constant 0 : i32
    return %c0_i32, %c0_i32_0 : i32, i32
  }
}

</mosaic_0001>

<llo_original>
// kernel: tpu_custom_call.1
$region0: #{tpu_custom_call.1}
  #allocation0 [shape = 'u32[]', space=smem, size = 0x4, offset = 0x4, fixed_abs, tag = 'smem constant byte address 0x4 - core index']
  #allocation1 [shape = 'u32[144,128]{1,0:T(1,128)}', space=vmem, size = 0x12000, scoped, tag = 'internal scratch']
  #allocation2 [shape = 'f32[16,128]{1,0:T(8,128)}', space=vmem, size = 0x2000, scoped, tag = 'scratch operand']
  #allocation3 [shape = 'f32[128,128]{1,0:T(8,128)}', space=vmem, size = 0x10000, scoped, tag = 'scratch operand']
  %s0 = inlined_call_operand.hbm [shape: bf16[128,128], index: 0, kind: input, shape index: {}]
  %s1 = inlined_call_operand.hbm [shape: bf16[128,128], index: 1, kind: input, shape index: {}]
  %s2 = inlined_call_operand.hbm [shape: bf16[128,128], index: 2, kind: input, shape index: {}]
  %s3 = inlined_call_operand.vmem [shape: f32[1,128], index: 3, kind: input, shape index: {}]
  %s4 = inlined_call_operand.hbm [shape: bf16[128,128], index: 4, kind: input, shape index: {}]
  %s5 = inlined_call_operand.vmem [shape: f32[1,128], index: 5, kind: input, shape index: {}]
  %s6 = inlined_call_operand.hbm [shape: f32[16,128], index: 6, kind: output, shape index: {}]
  %s7 = sld [smem:[#allocation0]]
  $region62: #{tpu_custom_call.1} parent=0
    _
  %s9 = ssub.s32 1, %s7
  %s10 = scalar_select 0, %s9, %s7
  $region1: #{tpu_custom_call.1} parent=0
    #allocation4 [shape = 'u8[32768]{0}', space=vmem, size = 0x8000, scoped, tag = 'input window, operand 0, single buffered']
    #allocation5 [shape = 's32[1]{0}', space=sflag, size = 0x4, scoped, tag = 'scoped memory for tpu_custom_call.1']
    #allocation6 [shape = 's32[1]{0}', space=sflag, size = 0x4, scoped, tag = 'scoped memory for tpu_custom_call.1']
    #allocation7 [shape = 'u8[32768]{0}', space=vmem, size = 0x8000, scoped, tag = 'input window, operand 1, single buffered']
    #allocation8 [shape = 's32[1]{0}', space=sflag, size = 0x4, scoped, tag = 'scoped memory for tpu_custom_call.1']
    #allocation9 [shape = 'u8[32768]{0}', space=vmem, size = 0x8000, scoped, tag = 'input window, operand 2, single buffered']
    #allocation10 [shape = 'u8[32768]{0}', space=vmem, size = 0x8000, scoped, tag = 'input window, operand 4, single buffered']
    #allocation11 [shape = 's32[1]{0}', space=sflag, size = 0x4, scoped, tag = 'scoped memory for tpu_custom_call.1']
    #allocation12 [shape = 'u8[8192]{0}', space=vmem, size = 0x2000, scoped, tag = 'output window, operand 0, single buffered']
    %11 = vsyncpa [#allocation5], 0
    %12 = vsyncpa [#allocation8], 0
    %13 = vsyncpa [#allocation11], 0
    %14 = vsyncpa [#allocation6], 0
    // Predicated region
    $region2: #{tpu_custom_call.1} parent=1 // pred_check
      _
    $region3: #{tpu_custom_call.1} parent=1 // pred_check_branch
      %16 = sbr.rel (0) target = $region5
    $region4: #{tpu_custom_call.1} parent=1 // pred_region
      %s18 = ssub.s32 1024, 1024
      %19 = vsyncadd [#allocation5], %s18
      %s20 = sshll.u32 [#allocation4], 4
      %s21 = int_to_ptr.vmem [resolvable:$true] %s20
      %26 = dma.hbm_to_vmem [thread:$0]  %s0, 1024, %s21, [#allocation5], 64, 64, 4
    $region5: #{tpu_custom_call.1} parent=1 // pred_fallthru
      _
    // Predicated region
    $region6: #{tpu_custom_call.1} parent=1 // pred_check
      _
    $region7: #{tpu_custom_call.1} parent=1 // pred_check_branch
      %28 = sbr.rel (0) target = $region9
    $region8: #{tpu_custom_call.1} parent=1 // pred_region
      %s30 = ssub.s32 1024, 1024
      %31 = vsyncadd [#allocation8], %s30
      %s32 = sshll.u32 [#allocation7], 4
      %s33 = int_to_ptr.vmem [resolvable:$true] %s32
      %38 = dma.hbm_to_vmem [thread:$0]  %s1, 1024, %s33, [#allocation8], 64, 64, 4
    $region9: #{tpu_custom_call.1} parent=1 // pred_fallthru
      _
    // Predicated region
    $region10: #{tpu_custom_call.1} parent=1 // pred_check
      _
    $region11: #{tpu_custom_call.1} parent=1 // pred_check_branch
      %40 = sbr.rel (0) target = $region13
    $region12: #{tpu_custom_call.1} parent=1 // pred_region
      %s42 = ssub.s32 1024, 1024
      %43 = vsyncadd [#allocation8], %s42
      %s44 = sshll.u32 [#allocation9], 4
      %s45 = int_to_ptr.vmem [resolvable:$true] %s44
      %50 = dma.hbm_to_vmem [thread:$0]  %s2, 1024, %s45, [#allocation8], 64, 64, 4
    $region13: #{tpu_custom_call.1} parent=1 // pred_fallthru
      _
    // Predicated region
    $region14: #{tpu_custom_call.1} parent=1 // pred_check
      _
    $region15: #{tpu_custom_call.1} parent=1 // pred_check_branch
      %52 = sbr.rel (0) target = $region17
    $region16: #{tpu_custom_call.1} parent=1 // pred_region
      _
    $region17: #{tpu_custom_call.1} parent=1 // pred_fallthru
      _
    // Predicated region
    $region18: #{tpu_custom_call.1} parent=1 // pred_check
      _
    $region19: #{tpu_custom_call.1} parent=1 // pred_check_branch
      %54 = sbr.rel (0) target = $region21
    $region20: #{tpu_custom_call.1} parent=1 // pred_region
      %s56 = ssub.s32 1024, 1024
      %57 = vsyncadd [#allocation11], %s56
      %s58 = sshll.u32 [#allocation10], 4
      %s59 = int_to_ptr.vmem [resolvable:$true] %s58
      %64 = dma.hbm_to_vmem [thread:$0]  %s4, 1024, %s59, [#allocation11], 64, 64, 4
    $region21: #{tpu_custom_call.1} parent=1 // pred_fallthru
      _
    // Predicated region
    $region22: #{tpu_custom_call.1} parent=1 // pred_check
      _
    $region23: #{tpu_custom_call.1} parent=1 // pred_check_branch
      %66 = sbr.rel (0) target = $region25
    $region24: #{tpu_custom_call.1} parent=1 // pred_region
      _
    $region25: #{tpu_custom_call.1} parent=1 // pred_fallthru
      _
    // Predicated region
    $region26: #{tpu_custom_call.1} parent=1 // pred_check
      _
    $region27: #{tpu_custom_call.1} parent=1 // pred_check_branch
      %68 = sbr.rel (0) target = $region29
    $region28: #{tpu_custom_call.1} parent=1 // pred_region
      %69 = dma.done [#allocation5], 1024
    $region29: #{tpu_custom_call.1} parent=1 // pred_fallthru
      _
    // Predicated region
    $region30: #{tpu_custom_call.1} parent=1 // pred_check
      _
    $region31: #{tpu_custom_call.1} parent=1 // pred_check_branch
      %71 = sbr.rel (0) target = $region33
    $region32: #{tpu_custom_call.1} parent=1 // pred_region
      %72 = dma.done [#allocation8], 1024
    $region33: #{tpu_custom_call.1} parent=1 // pred_fallthru
      _
    // Predicated region
    $region34: #{tpu_custom_call.1} parent=1 // pred_check
      _
    $region35: #{tpu_custom_call.1} parent=1 // pred_check_branch
      %74 = sbr.rel (0) target = $region37
    $region36: #{tpu_custom_call.1} parent=1 // pred_region
      %75 = dma.done [#allocation8], 1024
    $region37: #{tpu_custom_call.1} parent=1 // pred_fallthru
      _
    // Predicated region
    $region38: #{tpu_custom_call.1} parent=1 // pred_check
      _
    $region39: #{tpu_custom_call.1} parent=1 // pred_check_branch
      %77 = sbr.rel (0) target = $region41
    $region40: #{tpu_custom_call.1} parent=1 // pred_region
      %78 = dma.done [#allocation11], 1024
    $region41: #{tpu_custom_call.1} parent=1 // pred_fallthru
      _
    %v80 = vld [vmem:[#allocation4] sm:$0xf]
    %v81 = vld [vmem:[#allocation4 + $0x4] sm:$0xf]
    %v82 = vld [vmem:[#allocation4 + $0x8] sm:$0xf]
    %v83 = vld [vmem:[#allocation4 + $0xc] sm:$0xf]
    %v84 = vld [vmem:[#allocation4 + $0x10] sm:$0xf]
    %v85 = vld [vmem:[#allocation4 + $0x14] sm:$0xf]
    %v86 = vld [vmem:[#allocation4 + $0x18] sm:$0xf]
    %v87 = vld [vmem:[#allocation4 + $0x1c] sm:$0xf]
    %v88 = vld [vmem:[#allocation4 + $0x20] sm:$0xf]
    %v89 = vld [vmem:[#allocation4 + $0x24] sm:$0xf]
    %v90 = vld [vmem:[#allocation4 + $0x28] sm:$0xf]
    %v91 = vld [vmem:[#allocation4 + $0x2c] sm:$0xf]
    %v92 = vld [vmem:[#allocation4 + $0x30] sm:$0xf]
    %v93 = vld [vmem:[#allocation4 + $0x34] sm:$0xf]
    %v94 = vld [vmem:[#allocation4 + $0x38] sm:$0xf]
    %v95 = vld [vmem:[#allocation4 + $0x3c] sm:$0xf]
    %v96 = vld [vmem:[#allocation7] sm:$0xf]
    %v97 = vld [vmem:[#allocation7 + $0x4] sm:$0xf]
    %v98 = vld [vmem:[#allocation7 + $0x8] sm:$0xf]
    %v99 = vld [vmem:[#allocation7 + $0xc] sm:$0xf]
    %v100 = vld [vmem:[#allocation7 + $0x10] sm:$0xf]
    %v101 = vld [vmem:[#allocation7 + $0x14] sm:$0xf]
    %v102 = vld [vmem:[#allocation7 + $0x18] sm:$0xf]
    %v103 = vld [vmem:[#allocation7 + $0x1c] sm:$0xf]
    %v104 = vld [vmem:[#allocation7 + $0x20] sm:$0xf]
    %v105 = vld [vmem:[#allocation7 + $0x24] sm:$0xf]
    %v106 = vld [vmem:[#allocation7 + $0x28] sm:$0xf]
    %v107 = vld [vmem:[#allocation7 + $0x2c] sm:$0xf]
    %v108 = vld [vmem:[#allocation7 + $0x30] sm:$0xf]
    %v109 = vld [vmem:[#allocation7 + $0x34] sm:$0xf]
    %v110 = vld [vmem:[#allocation7 + $0x38] sm:$0xf]
    %v111 = vld [vmem:[#allocation7 + $0x3c] sm:$0xf]
    %v112 = vld [vmem:[%s3] sm:$0x1]
    %v114 = vlaneseq
    %v115 = vshrl.u32 %v114, 7
    %v116 = vsub.s32 0, %v115
    %v117 = vrot.slane %v112, %v116
    %v135 = vunpack.c.l.b16 %v80
    %v136 = vunpack.c.l.b16 %v81
    %v137 = vunpack.c.l.b16 %v82
    %v138 = vunpack.c.l.b16 %v83
    %v139 = vunpack.c.l.b16 %v84
    %v140 = vunpack.c.l.b16 %v85
    %v141 = vunpack.c.l.b16 %v86
    %v142 = vunpack.c.l.b16 %v87
    %v143 = vunpack.c.l.b16 %v88
    %v144 = vunpack.c.l.b16 %v89
    %v145 = vunpack.c.l.b16 %v90
    %v146 = vunpack.c.l.b16 %v91
    %v147 = vunpack.c.l.b16 %v92
    %v148 = vunpack.c.l.b16 %v93
    %v149 = vunpack.c.l.b16 %v94
    %v150 = vunpack.c.l.b16 %v95
    %v151 = vpack.c.b16 %v136, %v135
    %v152 = vpack.c.b16 %v138, %v137
    %v153 = vpack.c.b16 %v140, %v139
    %v154 = vpack.c.b16 %v142, %v141
    %v155 = vpack.c.b16 %v144, %v143
    %v156 = vpack.c.b16 %v146, %v145
    %v157 = vpack.c.b16 %v148, %v147
    %v158 = vpack.c.b16 %v150, %v149
    %v183 = vunpack.c.l.b16 %v96
    %v184 = vunpack.c.l.b16 %v97
    %v185 = vunpack.c.l.b16 %v98
    %v186 = vunpack.c.l.b16 %v99
    %v187 = vunpack.c.l.b16 %v100
    %v188 = vunpack.c.l.b16 %v101
    %v189 = vunpack.c.l.b16 %v102
    %v190 = vunpack.c.l.b16 %v103
    %v191 = vunpack.c.l.b16 %v104
    %v192 = vunpack.c.l.b16 %v105
    %v193 = vunpack.c.l.b16 %v106
    %v194 = vunpack.c.l.b16 %v107
    %v195 = vunpack.c.l.b16 %v108
    %v196 = vunpack.c.l.b16 %v109
    %v197 = vunpack.c.l.b16 %v110
    %v198 = vunpack.c.l.b16 %v111
    %v199 = vpack.c.b16 %v184, %v183
    %v200 = vpack.c.b16 %v186, %v185
    %v201 = vpack.c.b16 %v188, %v187
    %v202 = vpack.c.b16 %v190, %v189
    %v203 = vpack.c.b16 %v192, %v191
    %v204 = vpack.c.b16 %v194, %v193
    %v205 = vpack.c.b16 %v196, %v195
    %v206 = vpack.c.b16 %v198, %v197
    %215 = vmatprep.subr.bf16.mxu0 0
    %216 = vmatpush1.bf16.msra.mxu0 %v199
    %217 = vmatprep.subr.bf16.mxu0 0
    %218 = vmatpush1.bf16.msra.mxu0 %v200
    %219 = vmatprep.subr.bf16.mxu0 0
    %220 = vmatpush1.bf16.msra.mxu0 %v201
    %221 = vmatprep.subr.bf16.mxu0 0
    %222 = vmatpush1.bf16.msra.mxu0 %v202
    %223 = vmatprep.subr.bf16.mxu0 0
    %224 = vmatpush1.bf16.msra.mxu0 %v203
    %225 = vmatprep.subr.bf16.mxu0 0
    %226 = vmatpush1.bf16.msra.mxu0 %v204
    %227 = vmatprep.subr.bf16.mxu0 0
    %228 = vmatpush1.bf16.msra.mxu0 %v205
    %229 = vmatprep.subr.bf16.mxu0 0
    %230 = vmatpush1.bf16.msra.mxu0 %v206
    %231 = vmatprep.subr.bf16.mxu0 0
    %232 = vmatpush1.bf16.msra.mxu0 0
    %233 = vmatprep.subr.bf16.mxu0 0
    %234 = vmatpush1.bf16.msra.mxu0 0
    %235 = vmatprep.subr.bf16.mxu0 0
    %236 = vmatpush1.bf16.msra.mxu0 0
    %237 = vmatprep.subr.bf16.mxu0 0
    %238 = vmatpush1.bf16.msra.mxu0 0
    %239 = vmatprep.subr.bf16.mxu0 0
    %240 = vmatpush1.bf16.msra.mxu0 0
    %241 = vmatprep.subr.bf16.mxu0 0
    %242 = vmatpush1.bf16.msra.mxu0 0
    %243 = vmatprep.subr.bf16.mxu0 0
    %244 = vmatpush1.bf16.msra.mxu0 0
    %245 = vmatprep.subr.bf16.mxu0 0
    %246 = vmatpush1.bf16.msra.mxu0 0
    %247 = vmatprep.mubr.bf16.mxu0 0
    %248 = vmatmul.mubr.bf16.gmra.mrb[0].mxu0 %v151
    %v249 = vpop.f32.mrb[0].mxu0
    %v250 = vadd.f32 %v117, %v249
    %v251 = vpop.f32.mrb[0].mxu0
    %v252 = vpop.f32.mrb[0].mxu0
    %v253 = vadd.f32 %v117, %v252
    %v254 = vpop.f32.mrb[0].mxu0
    %255 = vmatprep.mubr.bf16.mxu0 0
    %256 = vmatmul.mubr.bf16.gmra.mrb[0].mxu0 %v152
    %v257 = vpop.f32.mrb[0].mxu0
    %v258 = vadd.f32 %v117, %v257
    %v259 = vpop.f32.mrb[0].mxu0
    %v260 = vpop.f32.mrb[0].mxu0
    %v261 = vadd.f32 %v117, %v260
    %v262 = vpop.f32.mrb[0].mxu0
    %263 = vmatprep.mubr.bf16.mxu0 0
    %264 = vmatmul.mubr.bf16.gmra.mrb[0].mxu0 %v153
    %v265 = vpop.f32.mrb[0].mxu0
    %v266 = vadd.f32 %v117, %v265
    %v267 = vpop.f32.mrb[0].mxu0
    %v268 = vpop.f32.mrb[0].mxu0
    %v269 = vadd.f32 %v117, %v268
    %v270 = vpop.f32.mrb[0].mxu0
    %271 = vmatprep.mubr.bf16.mxu0 0
    %272 = vmatmul.mubr.bf16.gmra.mrb[0].mxu0 %v154
    %v273 = vpop.f32.mrb[0].mxu0
    %v274 = vadd.f32 %v117, %v273
    %v275 = vpop.f32.mrb[0].mxu0
    %v276 = vpop.f32.mrb[0].mxu0
    %v277 = vadd.f32 %v117, %v276
    %v278 = vpop.f32.mrb[0].mxu0
    %279 = vmatprep.mubr.bf16.mxu0 0
    %280 = vmatmul.mubr.bf16.gmra.mrb[0].mxu0 %v155
    %v281 = vpop.f32.mrb[0].mxu0
    %v282 = vadd.f32 %v117, %v281
    %v283 = vpop.f32.mrb[0].mxu0
    %v284 = vpop.f32.mrb[0].mxu0
    %v285 = vadd.f32 %v117, %v284
    %v286 = vpop.f32.mrb[0].mxu0
    %287 = vmatprep.mubr.bf16.mxu0 0
    %288 = vmatmul.mubr.bf16.gmra.mrb[0].mxu0 %v156
    %v289 = vpop.f32.mrb[0].mxu0
    %v290 = vadd.f32 %v117, %v289
    %v291 = vpop.f32.mrb[0].mxu0
    %v292 = vpop.f32.mrb[0].mxu0
    %v293 = vadd.f32 %v117, %v292
    %v294 = vpop.f32.mrb[0].mxu0
    %295 = vmatprep.mubr.bf16.mxu0 0
    %296 = vmatmul.mubr.bf16.gmra.mrb[0].mxu0 %v157
    %v297 = vpop.f32.mrb[0].mxu0
    %v298 = vadd.f32 %v117, %v297
    %v299 = vpop.f32.mrb[0].mxu0
    %v300 = vpop.f32.mrb[0].mxu0
    %v301 = vadd.f32 %v117, %v300
    %v302 = vpop.f32.mrb[0].mxu0
    %303 = vmatprep.mubr.bf16.mxu0 0
    %304 = vmatmul.mubr.bf16.gmra.mrb[0].mxu0 %v158
    %v305 = vpop.f32.mrb[0].mxu0
    %v306 = vadd.f32 %v117, %v305
    %v307 = vpop.f32.mrb[0].mxu0
    %v308 = vpop.f32.mrb[0].mxu0
    %v309 = vadd.f32 %v117, %v308
    %v310 = vpop.f32.mrb[0].mxu0
    %311 = vdwg.mxu0
    %312 = vst [vmem:[#allocation3] sm:$0xff] %v250
    %313 = vst [vmem:[#allocation3 + $0x8] sm:$0xff] %v253
    %314 = vst [vmem:[#allocation3 + $0x10] sm:$0xff] %v258
    %315 = vst [vmem:[#allocation3 + $0x18] sm:$0xff] %v261
    %316 = vst [vmem:[#allocation3 + $0x20] sm:$0xff] %v266
    %317 = vst [vmem:[#allocation3 + $0x28] sm:$0xff] %v269
    %318 = vst [vmem:[#allocation3 + $0x30] sm:$0xff] %v274
    %319 = vst [vmem:[#allocation3 + $0x38] sm:$0xff] %v277
    %320 = vst [vmem:[#allocation3 + $0x40] sm:$0xff] %v282
    %321 = vst [vmem:[#allocation3 + $0x48] sm:$0xff] %v285
    %322 = vst [vmem:[#allocation3 + $0x50] sm:$0xff] %v290
    %323 = vst [vmem:[#allocation3 + $0x58] sm:$0xff] %v293
    %324 = vst [vmem:[#allocation3 + $0x60] sm:$0xff] %v298
    %325 = vst [vmem:[#allocation3 + $0x68] sm:$0xff] %v301
    %326 = vst [vmem:[#allocation3 + $0x70] sm:$0xff] %v306
    %327 = vst [vmem:[#allocation3 + $0x78] sm:$0xff] %v309
    %v328 = vld [vmem:[#allocation9] sm:$0xf]
    %v329 = vld [vmem:[#allocation9 + $0x4] sm:$0xf]
    %v330 = vld [vmem:[#allocation9 + $0x8] sm:$0xf]
    %v331 = vld [vmem:[#allocation9 + $0xc] sm:$0xf]
    %v332 = vld [vmem:[#allocation9 + $0x10] sm:$0xf]
    %v333 = vld [vmem:[#allocation9 + $0x14] sm:$0xf]
    %v334 = vld [vmem:[#allocation9 + $0x18] sm:$0xf]
    %v335 = vld [vmem:[#allocation9 + $0x1c] sm:$0xf]
    %v336 = vld [vmem:[#allocation9 + $0x20] sm:$0xf]
    %v337 = vld [vmem:[#allocation9 + $0x24] sm:$0xf]
    %v338 = vld [vmem:[#allocation9 + $0x28] sm:$0xf]
    %v339 = vld [vmem:[#allocation9 + $0x2c] sm:$0xf]
    %v340 = vld [vmem:[#allocation9 + $0x30] sm:$0xf]
    %v341 = vld [vmem:[#allocation9 + $0x34] sm:$0xf]
    %v342 = vld [vmem:[#allocation9 + $0x38] sm:$0xf]
    %v343 = vld [vmem:[#allocation9 + $0x3c] sm:$0xf]
    %p344 = scmp.eq.s32.totalorder 0, 0
    // Predicated region
    $region42: #{tpu_custom_call.1} parent=1 // pred_check
      %p345 = pneg %p344
    $region43: #{tpu_custom_call.1} parent=1 // pred_check_branch
      %347 = sbr.rel (%p345) target = $region45
    $region44: #{tpu_custom_call.1} parent=1 // pred_region
      %v348 = vld [vmem:[#allocation3] sm:$0xff]
      %v349 = vld [vmem:[#allocation3 + $0x8] sm:$0xff]
      %v350 = vtanh.pop %v348
      %v351 = vtanh.pop %v349
      %s352 = scalar_lea.vmem [#allocation3], 16
      %v353 = vld [vmem:[%s352] sm:$0xff]
      %v354 = vld [vmem:[%s352 + $0x8] sm:$0xff]
      %v355 = vpack.c.bf16 %v351, %v350
      %v372 = vunpack.c.l.b16 %v328
      %v373 = vunpack.c.l.b16 %v329
      %v374 = vunpack.c.l.b16 %v330
      %v375 = vunpack.c.l.b16 %v331
      %v376 = vunpack.c.l.b16 %v332
      %v377 = vunpack.c.l.b16 %v333
      %v378 = vunpack.c.l.b16 %v334
      %v379 = vunpack.c.l.b16 %v335
      %v380 = vunpack.c.l.b16 %v336
      %v381 = vunpack.c.l.b16 %v337
      %v382 = vunpack.c.l.b16 %v338
      %v383 = vunpack.c.l.b16 %v339
      %v384 = vunpack.c.l.b16 %v340
      %v385 = vunpack.c.l.b16 %v341
      %v386 = vunpack.c.l.b16 %v342
      %v387 = vunpack.c.l.b16 %v343
      %v388 = vpack.c.b16 %v373, %v372
      %v389 = vpack.c.b16 %v375, %v374
      %v390 = vpack.c.b16 %v377, %v376
      %v391 = vpack.c.b16 %v379, %v378
      %v392 = vpack.c.b16 %v381, %v380
      %v393 = vpack.c.b16 %v383, %v382
      %v394 = vpack.c.b16 %v385, %v384
      %v395 = vpack.c.b16 %v387, %v386
      %404 = vmatprep.subr.bf16.mxu0 0
      %405 = vmatpush1.bf16.msra.mxu0 %v388
      %406 = vmatprep.subr.bf16.mxu0 0
      %407 = vmatpush1.bf16.msra.mxu0 %v389
      %408 = vmatprep.subr.bf16.mxu0 0
      %409 = vmatpush1.bf16.msra.mxu0 %v390
      %410 = vmatprep.subr.bf16.mxu0 0
      %411 = vmatpush1.bf16.msra.mxu0 %v391
      %412 = vmatprep.subr.bf16.mxu0 0
      %413 = vmatpush1.bf16.msra.mxu0 %v392
      %414 = vmatprep.subr.bf16.mxu0 0
      %415 = vmatpush1.bf16.msra.mxu0 %v393
      %416 = vmatprep.subr.bf16.mxu0 0
      %417 = vmatpush1.bf16.msra.mxu0 %v394
      %418 = vmatprep.subr.bf16.mxu0 0
      %419 = vmatpush1.bf16.msra.mxu0 %v395
      %420 = vmatprep.subr.bf16.mxu0 0
      %421 = vmatpush1.bf16.msra.mxu0 0
      %422 = vmatprep.subr.bf16.mxu0 0
      %423 = vmatpush1.bf16.msra.mxu0 0
      %424 = vmatprep.subr.bf16.mxu0 0
      %425 = vmatpush1.bf16.msra.mxu0 0
      %426 = vmatprep.subr.bf16.mxu0 0
      %427 = vmatpush1.bf16.msra.mxu0 0
      %428 = vmatprep.subr.bf16.mxu0 0
      %429 = vmatpush1.bf16.msra.mxu0 0
      %430 = vmatprep.subr.bf16.mxu0 0
      %431 = vmatpush1.bf16.msra.mxu0 0
      %432 = vmatprep.subr.bf16.mxu0 0
      %433 = vmatpush1.bf16.msra.mxu0 0
      %434 = vmatprep.subr.bf16.mxu0 0
      %435 = vmatpush1.bf16.msra.mxu0 0
      %436 = vmatprep.mubr.bf16.mxu0 0
      %437 = vmatmul.mubr.bf16.gmra.mrb[0].mxu0 %v355
      %v438 = vpop.f32.mrb[0].mxu0
      %v439 = vadd.f32 0.0, %v438
      %v440 = vpop.f32.mrb[0].mxu0
      %v441 = vpop.f32.mrb[0].mxu0
      %v442 = vadd.f32 0.0, %v441
      %v443 = vpop.f32.mrb[0].mxu0
      %444 = vdwg.mxu0
      %v445 = vadd.f32 %v353, %v439
      %v446 = vadd.f32 %v354, %v442
      %v447 = vtanh.pop %v445
      %v448 = vtanh.pop %v446
      %s449 = scalar_lea.vmem [#allocation3], 32
      %v450 = vld [vmem:[%s449] sm:$0xff]
      %v451 = vld [vmem:[%s449 + $0x8] sm:$0xff]
      %v452 = vpack.c.bf16 %v448, %v447
      %453 = vmatprep.subr.bf16.mxu0 0
      %454 = vmatpush1.bf16.msra.mxu0 %v388
      %455 = vmatprep.subr.bf16.mxu0 0
      %456 = vmatpush1.bf16.msra.mxu0 %v389
      %457 = vmatprep.subr.bf16.mxu0 0
      %458 = vmatpush1.bf16.msra.mxu0 %v390
      %459 = vmatprep.subr.bf16.mxu0 0
      %460 = vmatpush1.bf16.msra.mxu0 %v391
      %461 = vmatprep.subr.bf16.mxu0 0
      %462 = vmatpush1.bf16.msra.mxu0 %v392
      %463 = vmatprep.subr.bf16.mxu0 0
      %464 = vmatpush1.bf16.msra.mxu0 %v393
      %465 = vmatprep.subr.bf16.mxu0 0
      %466 = vmatpush1.bf16.msra.mxu0 %v394
      %467 = vmatprep.subr.bf16.mxu0 0
      %468 = vmatpush1.bf16.msra.mxu0 %v395
      %469 = vmatprep.subr.bf16.mxu0 0
      %470 = vmatpush1.bf16.msra.mxu0 0
      %471 = vmatprep.subr.bf16.mxu0 0
      %472 = vmatpush1.bf16.msra.mxu0 0
      %473 = vmatprep.subr.bf16.mxu0 0
      %474 = vmatpush1.bf16.msra.mxu0 0
      %475 = vmatprep.subr.bf16.mxu0 0
      %476 = vmatpush1.bf16.msra.mxu0 0
      %477 = vmatprep.subr.bf16.mxu0 0
      %478 = vmatpush1.bf16.msra.mxu0 0
      %479 = vmatprep.subr.bf16.mxu0 0
      %480 = vmatpush1.bf16.msra.mxu0 0
      %481 = vmatprep.subr.bf16.mxu0 0
      %482 = vmatpush1.bf16.msra.mxu0 0
      %483 = vmatprep.subr.bf16.mxu0 0
      %484 = vmatpush1.bf16.msra.mxu0 0
      %485 = vmatprep.mubr.bf16.mxu0 0
      %486 = vmatmul.mubr.bf16.gmra.mrb[0].mxu0 %v452
      %v487 = vpop.f32.mrb[0].mxu0
      %v488 = vadd.f32 0.0, %v487
      %v489 = vpop.f32.mrb[0].mxu0
      %v490 = vpop.f32.mrb[0].mxu0
      %v491 = vadd.f32 0.0, %v490
      %v492 = vpop.f32.mrb[0].mxu0
      %493 = vdwg.mxu0
      %v494 = vadd.f32 %v450, %v488
      %v495 = vadd.f32 %v451, %v491
      %v496 = vtanh.pop %v494
      %v497 = vtanh.pop %v495
      %s498 = scalar_lea.vmem [#allocation3], 48
      %v499 = vld [vmem:[%s498] sm:$0xff]
      %v500 = vld [vmem:[%s498 + $0x8] sm:$0xff]
      %v501 = vpack.c.bf16 %v497, %v496
      %502 = vmatprep.subr.bf16.mxu0 0
      %503 = vmatpush1.bf16.msra.mxu0 %v388
      %504 = vmatprep.subr.bf16.mxu0 0
      %505 = vmatpush1.bf16.msra.mxu0 %v389
      %506 = vmatprep.subr.bf16.mxu0 0
      %507 = vmatpush1.bf16.msra.mxu0 %v390
      %508 = vmatprep.subr.bf16.mxu0 0
      %509 = vmatpush1.bf16.msra.mxu0 %v391
      %510 = vmatprep.subr.bf16.mxu0 0
      %511 = vmatpush1.bf16.msra.mxu0 %v392
      %512 = vmatprep.subr.bf16.mxu0 0
      %513 = vmatpush1.bf16.msra.mxu0 %v393
      %514 = vmatprep.subr.bf16.mxu0 0
      %515 = vmatpush1.bf16.msra.mxu0 %v394
      %516 = vmatprep.subr.bf16.mxu0 0
      %517 = vmatpush1.bf16.msra.mxu0 %v395
      %518 = vmatprep.subr.bf16.mxu0 0
      %519 = vmatpush1.bf16.msra.mxu0 0
      %520 = vmatprep.subr.bf16.mxu0 0
      %521 = vmatpush1.bf16.msra.mxu0 0
      %522 = vmatprep.subr.bf16.mxu0 0
      %523 = vmatpush1.bf16.msra.mxu0 0
      %524 = vmatprep.subr.bf16.mxu0 0
      %525 = vmatpush1.bf16.msra.mxu0 0
      %526 = vmatprep.subr.bf16.mxu0 0
      %527 = vmatpush1.bf16.msra.mxu0 0
      %528 = vmatprep.subr.bf16.mxu0 0
      %529 = vmatpush1.bf16.msra.mxu0 0
      %530 = vmatprep.subr.bf16.mxu0 0
      %531 = vmatpush1.bf16.msra.mxu0 0
      %532 = vmatprep.subr.bf16.mxu0 0
      %533 = vmatpush1.bf16.msra.mxu0 0
      %534 = vmatprep.mubr.bf16.mxu0 0
      %535 = vmatmul.mubr.bf16.gmra.mrb[0].mxu0 %v501
      %v536 = vpop.f32.mrb[0].mxu0
      %v537 = vadd.f32 0.0, %v536
      %v538 = vpop.f32.mrb[0].mxu0
      %v539 = vpop.f32.mrb[0].mxu0
      %v540 = vadd.f32 0.0, %v539
      %v541 = vpop.f32.mrb[0].mxu0
      %542 = vdwg.mxu0
      %v543 = vadd.f32 %v499, %v537
      %v544 = vadd.f32 %v500, %v540
      %v545 = vtanh.pop %v543
      %v546 = vtanh.pop %v544
      %s547 = scalar_lea.vmem [#allocation3], 64
      %v548 = vld [vmem:[%s547] sm:$0xff]
      %v549 = vld [vmem:[%s547 + $0x8] sm:$0xff]
      %v550 = vpack.c.bf16 %v546, %v545
      %551 = vmatprep.subr.bf16.mxu0 0
      %552 = vmatpush1.bf16.msra.mxu0 %v388
      %553 = vmatprep.subr.bf16.mxu0 0
      %554 = vmatpush1.bf16.msra.mxu0 %v389
      %555 = vmatprep.subr.bf16.mxu0 0
      %556 = vmatpush1.bf16.msra.mxu0 %v390
      %557 = vmatprep.subr.bf16.mxu0 0
      %558 = vmatpush1.bf16.msra.mxu0 %v391
      %559 = vmatprep.subr.bf16.mxu0 0
      %560 = vmatpush1.bf16.msra.mxu0 %v392
      %561 = vmatprep.subr.bf16.mxu0 0
      %562 = vmatpush1.bf16.msra.mxu0 %v393
      %563 = vmatprep.subr.bf16.mxu0 0
      %564 = vmatpush1.bf16.msra.mxu0 %v394
      %565 = vmatprep.subr.bf16.mxu0 0
      %566 = vmatpush1.bf16.msra.mxu0 %v395
      %567 = vmatprep.subr.bf16.mxu0 0
      %568 = vmatpush1.bf16.msra.mxu0 0
      %569 = vmatprep.subr.bf16.mxu0 0
      %570 = vmatpush1.bf16.msra.mxu0 0
      %571 = vmatprep.subr.bf16.mxu0 0
      %572 = vmatpush1.bf16.msra.mxu0 0
      %573 = vmatprep.subr.bf16.mxu0 0
      %574 = vmatpush1.bf16.msra.mxu0 0
      %575 = vmatprep.subr.bf16.mxu0 0
      %576 = vmatpush1.bf16.msra.mxu0 0
      %577 = vmatprep.subr.bf16.mxu0 0
      %578 = vmatpush1.bf16.msra.mxu0 0
      %579 = vmatprep.subr.bf16.mxu0 0
      %580 = vmatpush1.bf16.msra.mxu0 0
      %581 = vmatprep.subr.bf16.mxu0 0
      %582 = vmatpush1.bf16.msra.mxu0 0
      %583 = vmatprep.mubr.bf16.mxu0 0
      %584 = vmatmul.mubr.bf16.gmra.mrb[0].mxu0 %v550
      %v585 = vpop.f32.mrb[0].mxu0
      %v586 = vadd.f32 0.0, %v585
      %v587 = vpop.f32.mrb[0].mxu0
      %v588 = vpop.f32.mrb[0].mxu0
      %v589 = vadd.f32 0.0, %v588
      %v590 = vpop.f32.mrb[0].mxu0
      %591 = vdwg.mxu0
      %v592 = vadd.f32 %v548, %v586
      %v593 = vadd.f32 %v549, %v589
      %v594 = vtanh.pop %v592
      %v595 = vtanh.pop %v593
      %s596 = scalar_lea.vmem [#allocation3], 80
      %v597 = vld [vmem:[%s596] sm:$0xff]
      %v598 = vld [vmem:[%s596 + $0x8] sm:$0xff]
      %v599 = vpack.c.bf16 %v595, %v594
      %600 = vmatprep.subr.bf16.mxu0 0
      %601 = vmatpush1.bf16.msra.mxu0 %v388
      %602 = vmatprep.subr.bf16.mxu0 0
      %603 = vmatpush1.bf16.msra.mxu0 %v389
      %604 = vmatprep.subr.bf16.mxu0 0
      %605 = vmatpush1.bf16.msra.mxu0 %v390
      %606 = vmatprep.subr.bf16.mxu0 0
      %607 = vmatpush1.bf16.msra.mxu0 %v391
      %608 = vmatprep.subr.bf16.mxu0 0
      %609 = vmatpush1.bf16.msra.mxu0 %v392
      %610 = vmatprep.subr.bf16.mxu0 0
      %611 = vmatpush1.bf16.msra.mxu0 %v393
      %612 = vmatprep.subr.bf16.mxu0 0
      %613 = vmatpush1.bf16.msra.mxu0 %v394
      %614 = vmatprep.subr.bf16.mxu0 0
      %615 = vmatpush1.bf16.msra.mxu0 %v395
      %616 = vmatprep.subr.bf16.mxu0 0
      %617 = vmatpush1.bf16.msra.mxu0 0
      %618 = vmatprep.subr.bf16.mxu0 0
      %619 = vmatpush1.bf16.msra.mxu0 0
      %620 = vmatprep.subr.bf16.mxu0 0
      %621 = vmatpush1.bf16.msra.mxu0 0
      %622 = vmatprep.subr.bf16.mxu0 0
      %623 = vmatpush1.bf16.msra.mxu0 0
      %624 = vmatprep.subr.bf16.mxu0 0
      %625 = vmatpush1.bf16.msra.mxu0 0
      %626 = vmatprep.subr.bf16.mxu0 0
      %627 = vmatpush1.bf16.msra.mxu0 0
      %628 = vmatprep.subr.bf16.mxu0 0
      %629 = vmatpush1.bf16.msra.mxu0 0
      %630 = vmatprep.subr.bf16.mxu0 0
      %631 = vmatpush1.bf16.msra.mxu0 0
      %632 = vmatprep.mubr.bf16.mxu0 0
      %633 = vmatmul.mubr.bf16.gmra.mrb[0].mxu0 %v599
      %v634 = vpop.f32.mrb[0].mxu0
      %v635 = vadd.f32 0.0, %v634
      %v636 = vpop.f32.mrb[0].mxu0
      %v637 = vpop.f32.mrb[0].mxu0
      %v638 = vadd.f32 0.0, %v637
      %v639 = vpop.f32.mrb[0].mxu0
      %640 = vdwg.mxu0
      %v641 = vadd.f32 %v597, %v635
      %v642 = vadd.f32 %v598, %v638
      %v643 = vtanh.pop %v641
      %v644 = vtanh.pop %v642
      %s645 = scalar_lea.vmem [#allocation3], 96
      %v646 = vld [vmem:[%s645] sm:$0xff]
      %v647 = vld [vmem:[%s645 + $0x8] sm:$0xff]
      %v648 = vpack.c.bf16 %v644, %v643
      %649 = vmatprep.subr.bf16.mxu0 0
      %650 = vmatpush1.bf16.msra.mxu0 %v388
      %651 = vmatprep.subr.bf16.mxu0 0
      %652 = vmatpush1.bf16.msra.mxu0 %v389
      %653 = vmatprep.subr.bf16.mxu0 0
      %654 = vmatpush1.bf16.msra.mxu0 %v390
      %655 = vmatprep.subr.bf16.mxu0 0
      %656 = vmatpush1.bf16.msra.mxu0 %v391
      %657 = vmatprep.subr.bf16.mxu0 0
      %658 = vmatpush1.bf16.msra.mxu0 %v392
      %659 = vmatprep.subr.bf16.mxu0 0
      %660 = vmatpush1.bf16.msra.mxu0 %v393
      %661 = vmatprep.subr.bf16.mxu0 0
      %662 = vmatpush1.bf16.msra.mxu0 %v394
      %663 = vmatprep.subr.bf16.mxu0 0
      %664 = vmatpush1.bf16.msra.mxu0 %v395
      %665 = vmatprep.subr.bf16.mxu0 0
      %666 = vmatpush1.bf16.msra.mxu0 0
      %667 = vmatprep.subr.bf16.mxu0 0
      %668 = vmatpush1.bf16.msra.mxu0 0
      %669 = vmatprep.subr.bf16.mxu0 0
      %670 = vmatpush1.bf16.msra.mxu0 0
      %671 = vmatprep.subr.bf16.mxu0 0
      %672 = vmatpush1.bf16.msra.mxu0 0
      %673 = vmatprep.subr.bf16.mxu0 0
      %674 = vmatpush1.bf16.msra.mxu0 0
      %675 = vmatprep.subr.bf16.mxu0 0
      %676 = vmatpush1.bf16.msra.mxu0 0
      %677 = vmatprep.subr.bf16.mxu0 0
      %678 = vmatpush1.bf16.msra.mxu0 0
      %679 = vmatprep.subr.bf16.mxu0 0
      %680 = vmatpush1.bf16.msra.mxu0 0
      %681 = vmatprep.mubr.bf16.mxu0 0
      %682 = vmatmul.mubr.bf16.gmra.mrb[0].mxu0 %v648
      %v683 = vpop.f32.mrb[0].mxu0
      %v684 = vadd.f32 0.0, %v683
      %v685 = vpop.f32.mrb[0].mxu0
      %v686 = vpop.f32.mrb[0].mxu0
      %v687 = vadd.f32 0.0, %v686
      %v688 = vpop.f32.mrb[0].mxu0
      %689 = vdwg.mxu0
      %v690 = vadd.f32 %v646, %v684
      %v691 = vadd.f32 %v647, %v687
      %v692 = vtanh.pop %v690
      %v693 = vtanh.pop %v691
      %s694 = scalar_lea.vmem [#allocation3], 112
      %v695 = vld [vmem:[%s694] sm:$0xff]
      %v696 = vld [vmem:[%s694 + $0x8] sm:$0xff]
      %v697 = vpack.c.bf16 %v693, %v692
      %698 = vmatprep.subr.bf16.mxu0 0
      %699 = vmatpush1.bf16.msra.mxu0 %v388
      %700 = vmatprep.subr.bf16.mxu0 0
      %701 = vmatpush1.bf16.msra.mxu0 %v389
      %702 = vmatprep.subr.bf16.mxu0 0
      %703 = vmatpush1.bf16.msra.mxu0 %v390
      %704 = vmatprep.subr.bf16.mxu0 0
      %705 = vmatpush1.bf16.msra.mxu0 %v391
      %706 = vmatprep.subr.bf16.mxu0 0
      %707 = vmatpush1.bf16.msra.mxu0 %v392
      %708 = vmatprep.subr.bf16.mxu0 0
      %709 = vmatpush1.bf16.msra.mxu0 %v393
      %710 = vmatprep.subr.bf16.mxu0 0
      %711 = vmatpush1.bf16.msra.mxu0 %v394
      %712 = vmatprep.subr.bf16.mxu0 0
      %713 = vmatpush1.bf16.msra.mxu0 %v395
      %714 = vmatprep.subr.bf16.mxu0 0
      %715 = vmatpush1.bf16.msra.mxu0 0
      %716 = vmatprep.subr.bf16.mxu0 0
      %717 = vmatpush1.bf16.msra.mxu0 0
      %718 = vmatprep.subr.bf16.mxu0 0
      %719 = vmatpush1.bf16.msra.mxu0 0
      %720 = vmatprep.subr.bf16.mxu0 0
      %721 = vmatpush1.bf16.msra.mxu0 0
      %722 = vmatprep.subr.bf16.mxu0 0
      %723 = vmatpush1.bf16.msra.mxu0 0
      %724 = vmatprep.subr.bf16.mxu0 0
      %725 = vmatpush1.bf16.msra.mxu0 0
      %726 = vmatprep.subr.bf16.mxu0 0
      %727 = vmatpush1.bf16.msra.mxu0 0
      %728 = vmatprep.subr.bf16.mxu0 0
      %729 = vmatpush1.bf16.msra.mxu0 0
      %730 = vmatprep.mubr.bf16.mxu0 0
      %731 = vmatmul.mubr.bf16.gmra.mrb[0].mxu0 %v697
      %v732 = vpop.f32.mrb[0].mxu0
      %v733 = vadd.f32 0.0, %v732
      %v734 = vpop.f32.mrb[0].mxu0
      %v735 = vpop.f32.mrb[0].mxu0
      %v736 = vadd.f32 0.0, %v735
      %v737 = vpop.f32.mrb[0].mxu0
      %738 = vdwg.mxu0
      %v739 = vadd.f32 %v695, %v733
      %v740 = vadd.f32 %v696, %v736
      %v741 = vtanh.pop %v739
      %v742 = vtanh.pop %v740
      %743 = vst [vmem:[#allocation2] sm:$0xff] %v741
      %744 = vst [vmem:[#allocation2 + $0x8] sm:$0xff] %v742
    $region45: #{tpu_custom_call.1} parent=1 // pred_fallthru
      _
    %p745 = scmp.gt.s32.totalorder 0, 0
    // Predicated region
    $region46: #{tpu_custom_call.1} parent=1 // pred_check
      %p746 = pneg %p745
    $region47: #{tpu_custom_call.1} parent=1 // pred_check_branch
      %748 = sbr.rel (%p746) target = $region49
    $region48: #{tpu_custom_call.1} parent=1 // pred_region
      %v749 = vld [vmem:[#allocation2] sm:$0xff]
      %v750 = vld [vmem:[#allocation2 + $0x8] sm:$0xff]
      %v751 = vld [vmem:[#allocation3] sm:$0xff]
      %v752 = vld [vmem:[#allocation3 + $0x8] sm:$0xff]
      %v753 = vpack.c.bf16 %v750, %v749
      %v770 = vunpack.c.l.b16 %v328
      %v771 = vunpack.c.l.b16 %v329
      %v772 = vunpack.c.l.b16 %v330
      %v773 = vunpack.c.l.b16 %v331
      %v774 = vunpack.c.l.b16 %v332
      %v775 = vunpack.c.l.b16 %v333
      %v776 = vunpack.c.l.b16 %v334
      %v777 = vunpack.c.l.b16 %v335
      %v778 = vunpack.c.l.b16 %v336
      %v779 = vunpack.c.l.b16 %v337
      %v780 = vunpack.c.l.b16 %v338
      %v781 = vunpack.c.l.b16 %v339
      %v782 = vunpack.c.l.b16 %v340
      %v783 = vunpack.c.l.b16 %v341
      %v784 = vunpack.c.l.b16 %v342
      %v785 = vunpack.c.l.b16 %v343
      %v786 = vpack.c.b16 %v771, %v770
      %v787 = vpack.c.b16 %v773, %v772
      %v788 = vpack.c.b16 %v775, %v774
      %v789 = vpack.c.b16 %v777, %v776
      %v790 = vpack.c.b16 %v779, %v778
      %v791 = vpack.c.b16 %v781, %v780
      %v792 = vpack.c.b16 %v783, %v782
      %v793 = vpack.c.b16 %v785, %v784
      %802 = vmatprep.subr.bf16.mxu0 0
      %803 = vmatpush1.bf16.msra.mxu0 %v786
      %804 = vmatprep.subr.bf16.mxu0 0
      %805 = vmatpush1.bf16.msra.mxu0 %v787
      %806 = vmatprep.subr.bf16.mxu0 0
      %807 = vmatpush1.bf16.msra.mxu0 %v788
      %808 = vmatprep.subr.bf16.mxu0 0
      %809 = vmatpush1.bf16.msra.mxu0 %v789
      %810 = vmatprep.subr.bf16.mxu0 0
      %811 = vmatpush1.bf16.msra.mxu0 %v790
      %812 = vmatprep.subr.bf16.mxu0 0
      %813 = vmatpush1.bf16.msra.mxu0 %v791
      %814 = vmatprep.subr.bf16.mxu0 0
      %815 = vmatpush1.bf16.msra.mxu0 %v792
      %816 = vmatprep.subr.bf16.mxu0 0
      %817 = vmatpush1.bf16.msra.mxu0 %v793
      %818 = vmatprep.subr.bf16.mxu0 0
      %819 = vmatpush1.bf16.msra.mxu0 0
      %820 = vmatprep.subr.bf16.mxu0 0
      %821 = vmatpush1.bf16.msra.mxu0 0
      %822 = vmatprep.subr.bf16.mxu0 0
      %823 = vmatpush1.bf16.msra.mxu0 0
      %824 = vmatprep.subr.bf16.mxu0 0
      %825 = vmatpush1.bf16.msra.mxu0 0
      %826 = vmatprep.subr.bf16.mxu0 0
      %827 = vmatpush1.bf16.msra.mxu0 0
      %828 = vmatprep.subr.bf16.mxu0 0
      %829 = vmatpush1.bf16.msra.mxu0 0
      %830 = vmatprep.subr.bf16.mxu0 0
      %831 = vmatpush1.bf16.msra.mxu0 0
      %832 = vmatprep.subr.bf16.mxu0 0
      %833 = vmatpush1.bf16.msra.mxu0 0
      %834 = vmatprep.mubr.bf16.mxu0 0
      %835 = vmatmul.mubr.bf16.gmra.mrb[0].mxu0 %v753
      %v836 = vpop.f32.mrb[0].mxu0
      %v837 = vadd.f32 0.0, %v836
      %v838 = vpop.f32.mrb[0].mxu0
      %v839 = vpop.f32.mrb[0].mxu0
      %v840 = vadd.f32 0.0, %v839
      %v841 = vpop.f32.mrb[0].mxu0
      %842 = vdwg.mxu0
      %v843 = vadd.f32 %v751, %v837
      %v844 = vadd.f32 %v752, %v840
      %v845 = vtanh.pop %v843
      %v846 = vtanh.pop %v844
      %s847 = scalar_lea.vmem [#allocation3], 16
      %v848 = vld [vmem:[%s847] sm:$0xff]
      %v849 = vld [vmem:[%s847 + $0x8] sm:$0xff]
      %v850 = vpack.c.bf16 %v846, %v845
      %851 = vmatprep.subr.bf16.mxu0 0
      %852 = vmatpush1.bf16.msra.mxu0 %v786
      %853 = vmatprep.subr.bf16.mxu0 0
      %854 = vmatpush1.bf16.msra.mxu0 %v787
      %855 = vmatprep.subr.bf16.mxu0 0
      %856 = vmatpush1.bf16.msra.mxu0 %v788
      %857 = vmatprep.subr.bf16.mxu0 0
      %858 = vmatpush1.bf16.msra.mxu0 %v789
      %859 = vmatprep.subr.bf16.mxu0 0
      %860 = vmatpush1.bf16.msra.mxu0 %v790
      %861 = vmatprep.subr.bf16.mxu0 0
      %862 = vmatpush1.bf16.msra.mxu0 %v791
      %863 = vmatprep.subr.bf16.mxu0 0
      %864 = vmatpush1.bf16.msra.mxu0 %v792
      %865 = vmatprep.subr.bf16.mxu0 0
      %866 = vmatpush1.bf16.msra.mxu0 %v793
      %867 = vmatprep.subr.bf16.mxu0 0
      %868 = vmatpush1.bf16.msra.mxu0 0
      %869 = vmatprep.subr.bf16.mxu0 0
      %870 = vmatpush1.bf16.msra.mxu0 0
      %871 = vmatprep.subr.bf16.mxu0 0
      %872 = vmatpush1.bf16.msra.mxu0 0
      %873 = vmatprep.subr.bf16.mxu0 0
      %874 = vmatpush1.bf16.msra.mxu0 0
      %875 = vmatprep.subr.bf16.mxu0 0
      %876 = vmatpush1.bf16.msra.mxu0 0
      %877 = vmatprep.subr.bf16.mxu0 0
      %878 = vmatpush1.bf16.msra.mxu0 0
      %879 = vmatprep.subr.bf16.mxu0 0
      %880 = vmatpush1.bf16.msra.mxu0 0
      %881 = vmatprep.subr.bf16.mxu0 0
      %882 = vmatpush1.bf16.msra.mxu0 0
      %883 = vmatprep.mubr.bf16.mxu0 0
      %884 = vmatmul.mubr.bf16.gmra.mrb[0].mxu0 %v850
      %v885 = vpop.f32.mrb[0].mxu0
      %v886 = vadd.f32 0.0, %v885
      %v887 = vpop.f32.mrb[0].mxu0
      %v888 = vpop.f32.mrb[0].mxu0
      %v889 = vadd.f32 0.0, %v888
      %v890 = vpop.f32.mrb[0].mxu0
      %891 = vdwg.mxu0
      %v892 = vadd.f32 %v848, %v886
      %v893 = vadd.f32 %v849, %v889
      %v894 = vtanh.pop %v892
      %v895 = vtanh.pop %v893
      %s896 = scalar_lea.vmem [#allocation3], 32
      %v897 = vld [vmem:[%s896] sm:$0xff]
      %v898 = vld [vmem:[%s896 + $0x8] sm:$0xff]
      %v899 = vpack.c.bf16 %v895, %v894
      %900 = vmatprep.subr.bf16.mxu0 0
      %901 = vmatpush1.bf16.msra.mxu0 %v786
      %902 = vmatprep.subr.bf16.mxu0 0
      %903 = vmatpush1.bf16.msra.mxu0 %v787
      %904 = vmatprep.subr.bf16.mxu0 0
      %905 = vmatpush1.bf16.msra.mxu0 %v788
      %906 = vmatprep.subr.bf16.mxu0 0
      %907 = vmatpush1.bf16.msra.mxu0 %v789
      %908 = vmatprep.subr.bf16.mxu0 0
      %909 = vmatpush1.bf16.msra.mxu0 %v790
      %910 = vmatprep.subr.bf16.mxu0 0
      %911 = vmatpush1.bf16.msra.mxu0 %v791
      %912 = vmatprep.subr.bf16.mxu0 0
      %913 = vmatpush1.bf16.msra.mxu0 %v792
      %914 = vmatprep.subr.bf16.mxu0 0
      %915 = vmatpush1.bf16.msra.mxu0 %v793
      %916 = vmatprep.subr.bf16.mxu0 0
      %917 = vmatpush1.bf16.msra.mxu0 0
      %918 = vmatprep.subr.bf16.mxu0 0
      %919 = vmatpush1.bf16.msra.mxu0 0
      %920 = vmatprep.subr.bf16.mxu0 0
      %921 = vmatpush1.bf16.msra.mxu0 0
      %922 = vmatprep.subr.bf16.mxu0 0
      %923 = vmatpush1.bf16.msra.mxu0 0
      %924 = vmatprep.subr.bf16.mxu0 0
      %925 = vmatpush1.bf16.msra.mxu0 0
      %926 = vmatprep.subr.bf16.mxu0 0
      %927 = vmatpush1.bf16.msra.mxu0 0
      %928 = vmatprep.subr.bf16.mxu0 0
      %929 = vmatpush1.bf16.msra.mxu0 0
      %930 = vmatprep.subr.bf16.mxu0 0
      %931 = vmatpush1.bf16.msra.mxu0 0
      %932 = vmatprep.mubr.bf16.mxu0 0
      %933 = vmatmul.mubr.bf16.gmra.mrb[0].mxu0 %v899
      %v934 = vpop.f32.mrb[0].mxu0
      %v935 = vadd.f32 0.0, %v934
      %v936 = vpop.f32.mrb[0].mxu0
      %v937 = vpop.f32.mrb[0].mxu0
      %v938 = vadd.f32 0.0, %v937
      %v939 = vpop.f32.mrb[0].mxu0
      %940 = vdwg.mxu0
      %v941 = vadd.f32 %v897, %v935
      %v942 = vadd.f32 %v898, %v938
      %v943 = vtanh.pop %v941
      %v944 = vtanh.pop %v942
      %s945 = scalar_lea.vmem [#allocation3], 48
      %v946 = vld [vmem:[%s945] sm:$0xff]
      %v947 = vld [vmem:[%s945 + $0x8] sm:$0xff]
      %v948 = vpack.c.bf16 %v944, %v943
      %949 = vmatprep.subr.bf16.mxu0 0
      %950 = vmatpush1.bf16.msra.mxu0 %v786
      %951 = vmatprep.subr.bf16.mxu0 0
      %952 = vmatpush1.bf16.msra.mxu0 %v787
      %953 = vmatprep.subr.bf16.mxu0 0
      %954 = vmatpush1.bf16.msra.mxu0 %v788
      %955 = vmatprep.subr.bf16.mxu0 0
      %956 = vmatpush1.bf16.msra.mxu0 %v789
      %957 = vmatprep.subr.bf16.mxu0 0
      %958 = vmatpush1.bf16.msra.mxu0 %v790
      %959 = vmatprep.subr.bf16.mxu0 0
      %960 = vmatpush1.bf16.msra.mxu0 %v791
      %961 = vmatprep.subr.bf16.mxu0 0
      %962 = vmatpush1.bf16.msra.mxu0 %v792
      %963 = vmatprep.subr.bf16.mxu0 0
      %964 = vmatpush1.bf16.msra.mxu0 %v793
      %965 = vmatprep.subr.bf16.mxu0 0
      %966 = vmatpush1.bf16.msra.mxu0 0
      %967 = vmatprep.subr.bf16.mxu0 0
      %968 = vmatpush1.bf16.msra.mxu0 0
      %969 = vmatprep.subr.bf16.mxu0 0
      %970 = vmatpush1.bf16.msra.mxu0 0
      %971 = vmatprep.subr.bf16.mxu0 0
      %972 = vmatpush1.bf16.msra.mxu0 0
      %973 = vmatprep.subr.bf16.mxu0 0
      %974 = vmatpush1.bf16.msra.mxu0 0
      %975 = vmatprep.subr.bf16.mxu0 0
      %976 = vmatpush1.bf16.msra.mxu0 0
      %977 = vmatprep.subr.bf16.mxu0 0
      %978 = vmatpush1.bf16.msra.mxu0 0
      %979 = vmatprep.subr.bf16.mxu0 0
      %980 = vmatpush1.bf16.msra.mxu0 0
      %981 = vmatprep.mubr.bf16.mxu0 0
      %982 = vmatmul.mubr.bf16.gmra.mrb[0].mxu0 %v948
      %v983 = vpop.f32.mrb[0].mxu0
      %v984 = vadd.f32 0.0, %v983
      %v985 = vpop.f32.mrb[0].mxu0
      %v986 = vpop.f32.mrb[0].mxu0
      %v987 = vadd.f32 0.0, %v986
      %v988 = vpop.f32.mrb[0].mxu0
      %989 = vdwg.mxu0
      %v990 = vadd.f32 %v946, %v984
      %v991 = vadd.f32 %v947, %v987
      %v992 = vtanh.pop %v990
      %v993 = vtanh.pop %v991
      %s994 = scalar_lea.vmem [#allocation3], 64
      %v995 = vld [vmem:[%s994] sm:$0xff]
      %v996 = vld [vmem:[%s994 + $0x8] sm:$0xff]
      %v997 = vpack.c.bf16 %v993, %v992
      %998 = vmatprep.subr.bf16.mxu0 0
      %999 = vmatpush1.bf16.msra.mxu0 %v786
      %1000 = vmatprep.subr.bf16.mxu0 0
      %1001 = vmatpush1.bf16.msra.mxu0 %v787
      %1002 = vmatprep.subr.bf16.mxu0 0
      %1003 = vmatpush1.bf16.msra.mxu0 %v788
      %1004 = vmatprep.subr.bf16.mxu0 0
      %1005 = vmatpush1.bf16.msra.mxu0 %v789
      %1006 = vmatprep.subr.bf16.mxu0 0
      %1007 = vmatpush1.bf16.msra.mxu0 %v790
      %1008 = vmatprep.subr.bf16.mxu0 0
      %1009 = vmatpush1.bf16.msra.mxu0 %v791
      %1010 = vmatprep.subr.bf16.mxu0 0
      %1011 = vmatpush1.bf16.msra.mxu0 %v792
      %1012 = vmatprep.subr.bf16.mxu0 0
      %1013 = vmatpush1.bf16.msra.mxu0 %v793
      %1014 = vmatprep.subr.bf16.mxu0 0
      %1015 = vmatpush1.bf16.msra.mxu0 0
      %1016 = vmatprep.subr.bf16.mxu0 0
      %1017 = vmatpush1.bf16.msra.mxu0 0
      %1018 = vmatprep.subr.bf16.mxu0 0
      %1019 = vmatpush1.bf16.msra.mxu0 0
      %1020 = vmatprep.subr.bf16.mxu0 0
      %1021 = vmatpush1.bf16.msra.mxu0 0
      %1022 = vmatprep.subr.bf16.mxu0 0
      %1023 = vmatpush1.bf16.msra.mxu0 0
      %1024 = vmatprep.subr.bf16.mxu0 0
      %1025 = vmatpush1.bf16.msra.mxu0 0
      %1026 = vmatprep.subr.bf16.mxu0 0
      %1027 = vmatpush1.bf16.msra.mxu0 0
      %1028 = vmatprep.subr.bf16.mxu0 0
      %1029 = vmatpush1.bf16.msra.mxu0 0
      %1030 = vmatprep.mubr.bf16.mxu0 0
      %1031 = vmatmul.mubr.bf16.gmra.mrb[0].mxu0 %v997
      %v1032 = vpop.f32.mrb[0].mxu0
      %v1033 = vadd.f32 0.0, %v1032
      %v1034 = vpop.f32.mrb[0].mxu0
      %v1035 = vpop.f32.mrb[0].mxu0
      %v1036 = vadd.f32 0.0, %v1035
      %v1037 = vpop.f32.mrb[0].mxu0
      %1038 = vdwg.mxu0
      %v1039 = vadd.f32 %v995, %v1033
      %v1040 = vadd.f32 %v996, %v1036
      %v1041 = vtanh.pop %v1039
      %v1042 = vtanh.pop %v1040
      %s1043 = scalar_lea.vmem [#allocation3], 80
      %v1044 = vld [vmem:[%s1043] sm:$0xff]
      %v1045 = vld [vmem:[%s1043 + $0x8] sm:$0xff]
      %v1046 = vpack.c.bf16 %v1042, %v1041
      %1047 = vmatprep.subr.bf16.mxu0 0
      %1048 = vmatpush1.bf16.msra.mxu0 %v786
      %1049 = vmatprep.subr.bf16.mxu0 0
      %1050 = vmatpush1.bf16.msra.mxu0 %v787
      %1051 = vmatprep.subr.bf16.mxu0 0
      %1052 = vmatpush1.bf16.msra.mxu0 %v788
      %1053 = vmatprep.subr.bf16.mxu0 0
      %1054 = vmatpush1.bf16.msra.mxu0 %v789
      %1055 = vmatprep.subr.bf16.mxu0 0
      %1056 = vmatpush1.bf16.msra.mxu0 %v790
      %1057 = vmatprep.subr.bf16.mxu0 0
      %1058 = vmatpush1.bf16.msra.mxu0 %v791
      %1059 = vmatprep.subr.bf16.mxu0 0
      %1060 = vmatpush1.bf16.msra.mxu0 %v792
      %1061 = vmatprep.subr.bf16.mxu0 0
      %1062 = vmatpush1.bf16.msra.mxu0 %v793
      %1063 = vmatprep.subr.bf16.mxu0 0
      %1064 = vmatpush1.bf16.msra.mxu0 0
      %1065 = vmatprep.subr.bf16.mxu0 0
      %1066 = vmatpush1.bf16.msra.mxu0 0
      %1067 = vmatprep.subr.bf16.mxu0 0
      %1068 = vmatpush1.bf16.msra.mxu0 0
      %1069 = vmatprep.subr.bf16.mxu0 0
      %1070 = vmatpush1.bf16.msra.mxu0 0
      %1071 = vmatprep.subr.bf16.mxu0 0
      %1072 = vmatpush1.bf16.msra.mxu0 0
      %1073 = vmatprep.subr.bf16.mxu0 0
      %1074 = vmatpush1.bf16.msra.mxu0 0
      %1075 = vmatprep.subr.bf16.mxu0 0
      %1076 = vmatpush1.bf16.msra.mxu0 0
      %1077 = vmatprep.subr.bf16.mxu0 0
      %1078 = vmatpush1.bf16.msra.mxu0 0
      %1079 = vmatprep.mubr.bf16.mxu0 0
      %1080 = vmatmul.mubr.bf16.gmra.mrb[0].mxu0 %v1046
      %v1081 = vpop.f32.mrb[0].mxu0
      %v1082 = vadd.f32 0.0, %v1081
      %v1083 = vpop.f32.mrb[0].mxu0
      %v1084 = vpop.f32.mrb[0].mxu0
      %v1085 = vadd.f32 0.0, %v1084
      %v1086 = vpop.f32.mrb[0].mxu0
      %1087 = vdwg.mxu0
      %v1088 = vadd.f32 %v1044, %v1082
      %v1089 = vadd.f32 %v1045, %v1085
      %v1090 = vtanh.pop %v1088
      %v1091 = vtanh.pop %v1089
      %s1092 = scalar_lea.vmem [#allocation3], 96
      %v1093 = vld [vmem:[%s1092] sm:$0xff]
      %v1094 = vld [vmem:[%s1092 + $0x8] sm:$0xff]
      %v1095 = vpack.c.bf16 %v1091, %v1090
      %1096 = vmatprep.subr.bf16.mxu0 0
      %1097 = vmatpush1.bf16.msra.mxu0 %v786
      %1098 = vmatprep.subr.bf16.mxu0 0
      %1099 = vmatpush1.bf16.msra.mxu0 %v787
      %1100 = vmatprep.subr.bf16.mxu0 0
      %1101 = vmatpush1.bf16.msra.mxu0 %v788
      %1102 = vmatprep.subr.bf16.mxu0 0
      %1103 = vmatpush1.bf16.msra.mxu0 %v789
      %1104 = vmatprep.subr.bf16.mxu0 0
      %1105 = vmatpush1.bf16.msra.mxu0 %v790
      %1106 = vmatprep.subr.bf16.mxu0 0
      %1107 = vmatpush1.bf16.msra.mxu0 %v791
      %1108 = vmatprep.subr.bf16.mxu0 0
      %1109 = vmatpush1.bf16.msra.mxu0 %v792
      %1110 = vmatprep.subr.bf16.mxu0 0
      %1111 = vmatpush1.bf16.msra.mxu0 %v793
      %1112 = vmatprep.subr.bf16.mxu0 0
      %1113 = vmatpush1.bf16.msra.mxu0 0
      %1114 = vmatprep.subr.bf16.mxu0 0
      %1115 = vmatpush1.bf16.msra.mxu0 0
      %1116 = vmatprep.subr.bf16.mxu0 0
      %1117 = vmatpush1.bf16.msra.mxu0 0
      %1118 = vmatprep.subr.bf16.mxu0 0
      %1119 = vmatpush1.bf16.msra.mxu0 0
      %1120 = vmatprep.subr.bf16.mxu0 0
      %1121 = vmatpush1.bf16.msra.mxu0 0
      %1122 = vmatprep.subr.bf16.mxu0 0
      %1123 = vmatpush1.bf16.msra.mxu0 0
      %1124 = vmatprep.subr.bf16.mxu0 0
      %1125 = vmatpush1.bf16.msra.mxu0 0
      %1126 = vmatprep.subr.bf16.mxu0 0
      %1127 = vmatpush1.bf16.msra.mxu0 0
      %1128 = vmatprep.mubr.bf16.mxu0 0
      %1129 = vmatmul.mubr.bf16.gmra.mrb[0].mxu0 %v1095
      %v1130 = vpop.f32.mrb[0].mxu0
      %v1131 = vadd.f32 0.0, %v1130
      %v1132 = vpop.f32.mrb[0].mxu0
      %v1133 = vpop.f32.mrb[0].mxu0
      %v1134 = vadd.f32 0.0, %v1133
      %v1135 = vpop.f32.mrb[0].mxu0
      %1136 = vdwg.mxu0
      %v1137 = vadd.f32 %v1093, %v1131
      %v1138 = vadd.f32 %v1094, %v1134
      %v1139 = vtanh.pop %v1137
      %v1140 = vtanh.pop %v1138
      %s1141 = scalar_lea.vmem [#allocation3], 112
      %v1142 = vld [vmem:[%s1141] sm:$0xff]
      %v1143 = vld [vmem:[%s1141 + $0x8] sm:$0xff]
      %v1144 = vpack.c.bf16 %v1140, %v1139
      %1145 = vmatprep.subr.bf16.mxu0 0
      %1146 = vmatpush1.bf16.msra.mxu0 %v786
      %1147 = vmatprep.subr.bf16.mxu0 0
      %1148 = vmatpush1.bf16.msra.mxu0 %v787
      %1149 = vmatprep.subr.bf16.mxu0 0
      %1150 = vmatpush1.bf16.msra.mxu0 %v788
      %1151 = vmatprep.subr.bf16.mxu0 0
      %1152 = vmatpush1.bf16.msra.mxu0 %v789
      %1153 = vmatprep.subr.bf16.mxu0 0
      %1154 = vmatpush1.bf16.msra.mxu0 %v790
      %1155 = vmatprep.subr.bf16.mxu0 0
      %1156 = vmatpush1.bf16.msra.mxu0 %v791
      %1157 = vmatprep.subr.bf16.mxu0 0
      %1158 = vmatpush1.bf16.msra.mxu0 %v792
      %1159 = vmatprep.subr.bf16.mxu0 0
      %1160 = vmatpush1.bf16.msra.mxu0 %v793
      %1161 = vmatprep.subr.bf16.mxu0 0
      %1162 = vmatpush1.bf16.msra.mxu0 0
      %1163 = vmatprep.subr.bf16.mxu0 0
      %1164 = vmatpush1.bf16.msra.mxu0 0
      %1165 = vmatprep.subr.bf16.mxu0 0
      %1166 = vmatpush1.bf16.msra.mxu0 0
      %1167 = vmatprep.subr.bf16.mxu0 0
      %1168 = vmatpush1.bf16.msra.mxu0 0
      %1169 = vmatprep.subr.bf16.mxu0 0
      %1170 = vmatpush1.bf16.msra.mxu0 0
      %1171 = vmatprep.subr.bf16.mxu0 0
      %1172 = vmatpush1.bf16.msra.mxu0 0
      %1173 = vmatprep.subr.bf16.mxu0 0
      %1174 = vmatpush1.bf16.msra.mxu0 0
      %1175 = vmatprep.subr.bf16.mxu0 0
      %1176 = vmatpush1.bf16.msra.mxu0 0
      %1177 = vmatprep.mubr.bf16.mxu0 0
      %1178 = vmatmul.mubr.bf16.gmra.mrb[0].mxu0 %v1144
      %v1179 = vpop.f32.mrb[0].mxu0
      %v1180 = vadd.f32 0.0, %v1179
      %v1181 = vpop.f32.mrb[0].mxu0
      %v1182 = vpop.f32.mrb[0].mxu0
      %v1183 = vadd.f32 0.0, %v1182
      %v1184 = vpop.f32.mrb[0].mxu0
      %1185 = vdwg.mxu0
      %v1186 = vadd.f32 %v1142, %v1180
      %v1187 = vadd.f32 %v1143, %v1183
      %v1188 = vtanh.pop %v1186
      %v1189 = vtanh.pop %v1187
      %1190 = vst [vmem:[#allocation2] sm:$0xff] %v1188
      %1191 = vst [vmem:[#allocation2 + $0x8] sm:$0xff] %v1189
    $region49: #{tpu_custom_call.1} parent=1 // pred_fallthru
      _
    // Predicated region
    $region50: #{tpu_custom_call.1} parent=1 // pred_check
      %p1192 = pneg %p344
    $region51: #{tpu_custom_call.1} parent=1 // pred_check_branch
      %1194 = sbr.rel (%p1192) target = $region53
    $region52: #{tpu_custom_call.1} parent=1 // pred_region
      %v1195 = vld [vmem:[#allocation2] sm:$0xff]
      %v1196 = vld [vmem:[#allocation2 + $0x8] sm:$0xff]
      %v1197 = vmax.f32 %v1195, 0.0
      %v1198 = vmax.f32 %v1196, 0.0
      %v1199 = vpack.c.bf16 %v1198, %v1197
      %v1200 = vld [vmem:[#allocation10] sm:$0xf]
      %v1201 = vld [vmem:[#allocation10 + $0x4] sm:$0xf]
      %v1202 = vld [vmem:[#allocation10 + $0x8] sm:$0xf]
      %v1203 = vld [vmem:[#allocation10 + $0xc] sm:$0xf]
      %v1204 = vld [vmem:[#allocation10 + $0x10] sm:$0xf]
      %v1205 = vld [vmem:[#allocation10 + $0x14] sm:$0xf]
      %v1206 = vld [vmem:[#allocation10 + $0x18] sm:$0xf]
      %v1207 = vld [vmem:[#allocation10 + $0x1c] sm:$0xf]
      %v1208 = vld [vmem:[#allocation10 + $0x20] sm:$0xf]
      %v1209 = vld [vmem:[#allocation10 + $0x24] sm:$0xf]
      %v1210 = vld [vmem:[#allocation10 + $0x28] sm:$0xf]
      %v1211 = vld [vmem:[#allocation10 + $0x2c] sm:$0xf]
      %v1212 = vld [vmem:[#allocation10 + $0x30] sm:$0xf]
      %v1213 = vld [vmem:[#allocation10 + $0x34] sm:$0xf]
      %v1214 = vld [vmem:[#allocation10 + $0x38] sm:$0xf]
      %v1215 = vld [vmem:[#allocation10 + $0x3c] sm:$0xf]
      %v1216 = vld [vmem:[%s5] sm:$0x1]
      %v1218 = vlaneseq
      %v1219 = vshrl.u32 %v1218, 7
      %v1220 = vsub.s32 0, %v1219
      %v1221 = vrot.slane %v1216, %v1220
      %v1239 = vunpack.c.l.b16 %v1200
      %v1240 = vunpack.c.l.b16 %v1201
      %v1241 = vunpack.c.l.b16 %v1202
      %v1242 = vunpack.c.l.b16 %v1203
      %v1243 = vunpack.c.l.b16 %v1204
      %v1244 = vunpack.c.l.b16 %v1205
      %v1245 = vunpack.c.l.b16 %v1206
      %v1246 = vunpack.c.l.b16 %v1207
      %v1247 = vunpack.c.l.b16 %v1208
      %v1248 = vunpack.c.l.b16 %v1209
      %v1249 = vunpack.c.l.b16 %v1210
      %v1250 = vunpack.c.l.b16 %v1211
      %v1251 = vunpack.c.l.b16 %v1212
      %v1252 = vunpack.c.l.b16 %v1213
      %v1253 = vunpack.c.l.b16 %v1214
      %v1254 = vunpack.c.l.b16 %v1215
      %v1255 = vpack.c.b16 %v1240, %v1239
      %v1256 = vpack.c.b16 %v1242, %v1241
      %v1257 = vpack.c.b16 %v1244, %v1243
      %v1258 = vpack.c.b16 %v1246, %v1245
      %v1259 = vpack.c.b16 %v1248, %v1247
      %v1260 = vpack.c.b16 %v1250, %v1249
      %v1261 = vpack.c.b16 %v1252, %v1251
      %v1262 = vpack.c.b16 %v1254, %v1253
      %1271 = vmatprep.subr.bf16.mxu0 0
      %1272 = vmatpush1.bf16.msra.mxu0 %v1255
      %1273 = vmatprep.subr.bf16.mxu0 0
      %1274 = vmatpush1.bf16.msra.mxu0 %v1256
      %1275 = vmatprep.subr.bf16.mxu0 0
      %1276 = vmatpush1.bf16.msra.mxu0 %v1257
      %1277 = vmatprep.subr.bf16.mxu0 0
      %1278 = vmatpush1.bf16.msra.mxu0 %v1258
      %1279 = vmatprep.subr.bf16.mxu0 0
      %1280 = vmatpush1.bf16.msra.mxu0 %v1259
      %1281 = vmatprep.subr.bf16.mxu0 0
      %1282 = vmatpush1.bf16.msra.mxu0 %v1260
      %1283 = vmatprep.subr.bf16.mxu0 0
      %1284 = vmatpush1.bf16.msra.mxu0 %v1261
      %1285 = vmatprep.subr.bf16.mxu0 0
      %1286 = vmatpush1.bf16.msra.mxu0 %v1262
      %1287 = vmatprep.subr.bf16.mxu0 0
      %1288 = vmatpush1.bf16.msra.mxu0 0
      %1289 = vmatprep.subr.bf16.mxu0 0
      %1290 = vmatpush1.bf16.msra.mxu0 0
      %1291 = vmatprep.subr.bf16.mxu0 0
      %1292 = vmatpush1.bf16.msra.mxu0 0
      %1293 = vmatprep.subr.bf16.mxu0 0
      %1294 = vmatpush1.bf16.msra.mxu0 0
      %1295 = vmatprep.subr.bf16.mxu0 0
      %1296 = vmatpush1.bf16.msra.mxu0 0
      %1297 = vmatprep.subr.bf16.mxu0 0
      %1298 = vmatpush1.bf16.msra.mxu0 0
      %1299 = vmatprep.subr.bf16.mxu0 0
      %1300 = vmatpush1.bf16.msra.mxu0 0
      %1301 = vmatprep.subr.bf16.mxu0 0
      %1302 = vmatpush1.bf16.msra.mxu0 0
      %1303 = vmatprep.mubr.bf16.mxu0 0
      %1304 = vmatmul.mubr.bf16.gmra.mrb[0].mxu0 %v1199
      %v1305 = vpop.f32.mrb[0].mxu0
      %v1306 = vadd.f32 %v1221, %v1305
      %v1307 = vpop.f32.mrb[0].mxu0
      %v1308 = vpop.f32.mrb[0].mxu0
      %v1309 = vadd.f32 %v1221, %v1308
      %v1310 = vpop.f32.mrb[0].mxu0
      %1311 = vdwg.mxu0
      %1312 = vst [vmem:[#allocation12] sm:$0xff] %v1306
      %1313 = vst [vmem:[#allocation12 + $0x8] sm:$0xff] %v1309
    $region53: #{tpu_custom_call.1} parent=1 // pred_fallthru
      _
    // Predicated region
    $region54: #{tpu_custom_call.1} parent=1 // pred_check
      _
    $region55: #{tpu_custom_call.1} parent=1 // pred_check_branch
      %1315 = sbr.rel (0) target = $region57
    $region56: #{tpu_custom_call.1} parent=1 // pred_region
      %s1317 = ssub.s32 256, 256
      %1318 = vsyncadd [#allocation6], %s1317
      %s1319 = sshll.u32 [#allocation12], 4
      %s1320 = int_to_ptr.vmem [resolvable:$true] %s1319
      %1325 = dma.vmem_to_hbm [thread:$0]  %s1320, 256, %s6, [#allocation6], 128, 128, 8
    $region57: #{tpu_custom_call.1} parent=1 // pred_fallthru
      _
    // Predicated region
    $region58: #{tpu_custom_call.1} parent=1 // pred_check
      _
    $region59: #{tpu_custom_call.1} parent=1 // pred_check_branch
      %1327 = sbr.rel (0) target = $region61
    $region60: #{tpu_custom_call.1} parent=1 // pred_region
      %1328 = dma.done [#allocation6], 256
    $region61: #{tpu_custom_call.1} parent=1 // pred_fallthru
      _
    %1329 = vsyncpa [#allocation5], 1
    %1330 = vsyncpa [#allocation8], 1
    %1331 = vsyncpa [#allocation11], 1
    %1332 = vsyncpa [#allocation6], 1

</llo_original>
